<compile_context>
chip_gen: v7x
topology: tpu7x:2x2x1
jax: 0.10.0
libtpu: 0.0.40
codegen_flags: <defaults>
</compile_context>

<pallas_src>
import math

import jax
import jax.numpy as jnp
from jax.experimental import pallas as pl
from jax.experimental.pallas import tpu as pltpu


# ----------------------------------------------------------------------------
# in-kernel math helpers
# ----------------------------------------------------------------------------
def _erf(x):
    # Numerical-Recipes erfc rational approximation; exp() and the approx reciprocal land on the EUP.
    z = jnp.abs(x)
    t = pl.reciprocal(1.0 + 0.5 * z, approx=True)
    poly = -1.26551223 + t * (1.00002368 + t * (0.37409196 + t * (0.09678418
           + t * (-0.18628806 + t * (0.27886807 + t * (-1.13520398
           + t * (1.48851587 + t * (-0.82215223 + t * 0.17087277))))))))
    erf_abs = 1.0 - t * jnp.exp(-z * z + poly)
    return jnp.where(x >= 0.0, erf_abs, -erf_abs)


def _gelu_exact(x):
    # nn.GELU() default (approximate='none'): 0.5 * x * (1 + erf(x / sqrt(2)))
    return 0.5 * x * (1.0 + _erf(x * 0.7071067811865476))


# ----------------------------------------------------------------------------
# Fused kernel: n_conv x (strided Conv1d + GLU) -> fc1 -> GELU -> fc2 -> +res -> LayerNorm
# ----------------------------------------------------------------------------
def _make_subsampler_kernel(n_conv, K, stride, TB, R, S_off, t_outs, c_ins):
    """R[l] = rows computed at layer l per tile; layer-l local row 0 has global output index
    j * TB * stride**(n_conv-1-l) + S_off[l]  (static geometry, j = time-tile id)."""

    def kernel(*refs):
        x_ref = refs[0]                                    # (W, C_in) halo'd input window, f32
        conv_w = refs[1:1 + n_conv]                        # (K*C_in_l, C_out2_l) bf16 fused taps
        conv_b = refs[1 + n_conv:1 + 2 * n_conv]           # (1, C_out2_l) f32
        w1_ref, w2_ref, gamma_ref, beta_ref = refs[1 + 2 * n_conv:5 + 2 * n_conv]
        o_ref = refs[5 + 2 * n_conv]                       # (TB, D)
        h_scr = refs[6 + 2 * n_conv:6 + 2 * n_conv + (n_conv - 1)]   # conv intermediates (VMEM)
        im_ref = refs[6 + 2 * n_conv + (n_conv - 1)]       # shared im2col scratch (VMEM)

        j = pl.program_id(1)

        src_ref = x_ref
        h = None
        for l in range(n_conv):
            rows = R[l]
            c_in = c_ins[l]
            kc = K * c_in
            # im2col: tap k of the stride-2 conv goes to lanes [k*c_in, (k+1)*c_in)
            for k in range(K):
                im_ref[0:rows, k * c_in:(k + 1) * c_in] = \
                    src_ref[pl.ds(k, rows, stride=stride), :]
            operand = im_ref[0:rows, 0:kc].astype(jnp.bfloat16)          # bf16 MXU operand
            y = jnp.dot(operand, conv_w[l][...], preferred_element_type=jnp.float32)
            y = y + conv_b[l][...]
            c_half = y.shape[-1] // 2
            h = y[:, :c_half] * jax.nn.sigmoid(y[:, c_half:])            # GLU (f32 elementwise)
            if l < n_conv - 1:
                # emulate conv zero-padding: zero halo rows whose global index is outside
                # [0, t_outs[l]); interior rows are untouched (no full-buffer zeroing).
                start = j * (TB * stride ** (n_conv - 1 - l)) + S_off[l]
                gidx = jax.lax.broadcasted_iota(jnp.int32, (rows, 1), 0) + start
                valid = (gidx >= 0) & (gidx < t_outs[l])
                h_scr[l][...] = jnp.where(valid, h, 0.0)
                src_ref = h_scr[l]

        # fc1 -> exact GELU -> fc2 -> +residual -> LayerNorm(eps=1e-5)   (num_hidden_layers == 0)
        r = h                                                            # (TB, D) f32 residual
        t = _gelu_exact(jnp.dot(r.astype(jnp.bfloat16), w1_ref[...],
                                preferred_element_type=jnp.float32))
        y = jnp.dot(t.astype(jnp.bfloat16), w2_ref[...],
                    preferred_element_type=jnp.float32) + r
        mu = jnp.mean(y, axis=-1, keepdims=True)
        d = y - mu
        var = jnp.mean(d * d, axis=-1, keepdims=True)                    # two-pass (stable)
        y_hat = d * jax.lax.rsqrt(var + 1e-5)
        o_ref[...] = (y_hat * gamma_ref[...] + beta_ref[...]).astype(o_ref.dtype)

    return kernel


# ----------------------------------------------------------------------------
# Forward wrapper (layout plumbing in plain JAX, hot path in one Pallas kernel)
# ----------------------------------------------------------------------------
def get_out_seq_lens(lengths, n_layers):
    out = lengths.astype(jnp.float32)
    for _ in range(n_layers):
        out = jnp.floor((out - 1.0) / 2.0 + 1.0)
    return out.astype(jnp.int32)


def subsampler_forward(params, x, attention_mask, time_block=128):
    """x: (B, T, C_in) channels-last; attention_mask: (B, T), 1 = valid position."""
    convs = params["convs"]
    n_conv = len(convs)
    K = int(convs[0][0].shape[-1])
    stride, pad = 2, K // 2
    B, T, C_in = x.shape
    D = convs[-1][0].shape[0] // 2               # out_dim (GLU halves the last conv's channels)

    # static per-layer conv output lengths
    t_outs = []
    t = T
    for _ in range(n_conv):
        t = (t + 2 * pad - K) // stride + 1
        t_outs.append(t)
    T_f = t_outs[-1]

    # ---- time tiling over the final conv-output axis ----
    TB = T_f if T_f <= time_block else time_block
    if TB < T_f and TB % 8 != 0:
        raise ValueError("time_block must be a multiple of 8 when tiling")
    n_tiles = -(-T_f // TB)

    # per-tile geometry (stride-2 receptive-field halo through the conv stack)
    R = [0] * n_conv
    S_off = [0] * n_conv
    R[n_conv - 1], S_off[n_conv - 1] = TB, 0
    for l in range(n_conv - 1, 0, -1):
        R[l - 1] = stride * R[l] + K - stride
        S_off[l - 1] = stride * S_off[l] - pad
    W = stride * R[0] + K - stride               # x rows per tile (incl. halo)
    F = -(stride * S_off[0] - pad)               # front zero-pad so all window starts are >= 0
    step = TB * stride ** n_conv                 # x-row advance per tile
    T_xpad = (n_tiles - 1) * step + W
    back = T_xpad - F - T
    assert back >= 0

    x_pad = jnp.pad(x, ((0, 0), (F, back), (0, 0)))
    # overlapping per-tile windows (halo = W - step rows): pure layout plumbing so the kernel's
    # x BlockSpec is a plain Blocked spec that auto double-buffers / streams from HBM.
    x_win = jnp.stack([x_pad[:, i * step:i * step + W, :] for i in range(n_tiles)], axis=1)

    # weight prep (layout only): conv (C_out2, C_in, K) -> fused-tap (K*C_in, C_out2), bf16 for MXU
    w_cats, b_rows, c_ins, ch_half = [], [], [], []
    for (w, b) in convs:
        c_out2, c_in, _ = w.shape
        w_cats.append(jnp.transpose(w, (2, 1, 0)).reshape(K * c_in, c_out2).astype(jnp.bfloat16))
        b_rows.append(b.reshape(1, -1))
        c_ins.append(c_in)
        ch_half.append(c_out2 // 2)
    w1 = params["w1"].astype(jnp.bfloat16)
    w2 = params["w2"].astype(jnp.bfloat16)

    kernel = _make_subsampler_kernel(n_conv, K, stride, TB, tuple(R), tuple(S_off),
                                     tuple(t_outs), tuple(c_ins))

    in_specs = (
        [pl.BlockSpec((None, None, W, C_in), lambda b, j: (b, j, 0, 0))]
        + [pl.BlockSpec(w.shape, lambda b, j: (0, 0)) for w in w_cats]
        + [pl.BlockSpec(bb.shape, lambda b, j: (0, 0)) for bb in b_rows]
        + [pl.BlockSpec(w1.shape, lambda b, j: (0, 0)),
           pl.BlockSpec(w2.shape, lambda b, j: (0, 0)),
           pl.BlockSpec(params["ln_gamma"].shape, lambda b, j: (0, 0)),
           pl.BlockSpec(params["ln_beta"].shape, lambda b, j: (0, 0))]
    )
    scratch_shapes = (
        [pltpu.VMEM((R[l], ch_half[l]), jnp.float32) for l in range(n_conv - 1)]
        + [pltpu.VMEM((max(R), K * max(c_ins)), jnp.float32)]            # shared im2col scratch
    )

    # TODO(synk): single-buffer the constant-index weight specs (pl.Buffered(1) / pl.ANY + one-time
    # copy) and move activation storage to bf16 once strided bf16 sublane reads are validated —
    # both reclaim VMEM headroom on v7x at production widths.
    y_full = pl.pallas_call(
        kernel,
        out_shape=jax.ShapeDtypeStruct((B, n_tiles * TB, D), x.dtype),
        grid=(B, n_tiles),
        in_specs=in_specs,
        out_specs=pl.BlockSpec((None, TB, D), lambda b, j: (b, j, 0)),
        scratch_shapes=scratch_shapes,
        compiler_params=pltpu.CompilerParams(
            dimension_semantics=("parallel", "parallel"),
            vmem_limit_bytes=48 * 1024 * 1024),
    )(x_win, *w_cats, *b_rows, w1, w2, params["ln_gamma"], params["ln_beta"])
    y = y_full[:, :T_f]

    # length bookkeeping / new attention mask (scalar work, plain JAX)
    lengths = jnp.sum(attention_mask, axis=-1).astype(jnp.int32)
    out_lengths = get_out_seq_lens(lengths, n_conv)
    new_mask = (jnp.arange(T_f)[None, :] < out_lengths[:, None]).astype(jnp.int32)
    # TODO(synk): num_hidden_layers > 0 uses HuggingFace WhisperEncoderLayer (external) - not in scope.
    return y, new_mask, None, None, None


# ----------------------------------------------------------------------------
# Params + pure-JAX reference (for correctness check)
# ----------------------------------------------------------------------------
def init_params(key, in_dim, mid_dim, out_dim, kernel_sizes):
    keys = jax.random.split(key, 2 * len(kernel_sizes) + 2)
    convs = []
    c_in = in_dim
    n = len(kernel_sizes)
    for i, k in enumerate(kernel_sizes):
        c_out2 = 2 * in_dim if i < n - 1 else 2 * out_dim
        fan_in = c_in * k
        w = jax.random.normal(keys[2 * i], (c_out2, c_in, k), jnp.float32) / math.sqrt(fan_in)
        b = 0.01 * jax.random.normal(keys[2 * i + 1], (c_out2,), jnp.float32)
        convs.append((w, b))
        c_in = c_out2 // 2
    w1 = jax.random.normal(keys[-2], (out_dim, mid_dim), jnp.float32) / math.sqrt(out_dim)
    w2 = jax.random.normal(keys[-1], (mid_dim, out_dim), jnp.float32) / math.sqrt(mid_dim)
    return dict(
        convs=convs,                              # torch Conv1d layout (C_out2, C_in, K)
        w1=w1,                                    # == torch fc1.weight.T
        w2=w2,                                    # == torch fc2.weight.T
        ln_gamma=jnp.ones((1, out_dim), jnp.float32),
        ln_beta=jnp.zeros((1, out_dim), jnp.float32),
    )


def reference_forward(params, x):
    with jax.default_matmul_precision("highest"):
        h = x
        for (w, b) in params["convs"]:
            k = w.shape[-1]
            out = jax.lax.conv_general_dilated(
                h, jnp.transpose(w, (2, 1, 0)), window_strides=(2,),
                padding=[(k // 2, k // 2)], dimension_numbers=("NWC", "WIO", "NWC"))
            out = out + b[None, None, :]
            c_half = out.shape[-1] // 2
            h = out[..., :c_half] * jax.nn.sigmoid(out[..., c_half:])
        r = h
        t = jax.nn.gelu(h @ params["w1"], approximate=False)
        y = t @ params["w2"] + r
        mu = y.mean(-1, keepdims=True)
        var = ((y - mu) ** 2).mean(-1, keepdims=True)
        return (y - mu) / jnp.sqrt(var + 1e-5) * params["ln_gamma"] + params["ln_beta"]


if __name__ == "__main__":
    B, T, in_dim, mid_dim, out_dim = 2, 128, 16, 64, 32
    kernel_sizes = [5, 5, 5]                      # conv_kernel_sizes='5,5,5'

    key = jax.random.PRNGKey(0)
    k_param, k_x = jax.random.split(key)
    params = init_params(k_param, in_dim, mid_dim, out_dim, kernel_sizes)

    x = jax.random.normal(k_x, (B, T, in_dim), jnp.float32)
    lengths = jnp.array([128, 100], dtype=jnp.int32)
    attention_mask = (jnp.arange(T)[None, :] < lengths[:, None]).astype(jnp.int32)

    # time_block=8 -> 2 time tiles per batch row, exercising the halo/masking path
    fwd = jax.jit(lambda p, xx, m: subsampler_forward(p, xx, m, time_block=8))
    y, new_mask, _, _, _ = fwd(params, x, attention_mask)
    jax.block_until_ready((y, new_mask))

    assert y.shape == (B, 16, out_dim), y.shape             # 128 -> 64 -> 32 -> 16
    assert new_mask.shape == (B, 16), new_mask.shape

    y_ref = reference_forward(params, x)
    max_err = float(jnp.max(jnp.abs(y - y_ref)))
    # bf16 MXU operands + approx EUP reciprocal -> compare at bf16-level tolerance
    assert jnp.allclose(y, y_ref, atol=5e-2, rtol=5e-2), max_err

    print("KERNEL_OK")
</pallas_src>

<mosaic_0001>
module attributes {stable_mosaic.version = 11 : i64} {
  func.func @kernel(%arg0: i32, %arg1: i32, %arg2: memref<1x1x85x16xf32, #tpu.memory_space<vmem>>, %arg3: memref<80x32xbf16, #tpu.memory_space<vmem>>, %arg4: memref<80x32xbf16, #tpu.memory_space<vmem>>, %arg5: memref<80x64xbf16, #tpu.memory_space<vmem>>, %arg6: memref<1x32xf32, #tpu.memory_space<vmem>>, %arg7: memref<1x32xf32, #tpu.memory_space<vmem>>, %arg8: memref<1x64xf32, #tpu.memory_space<vmem>>, %arg9: memref<32x64xbf16, #tpu.memory_space<vmem>>, %arg10: memref<64x32xbf16, #tpu.memory_space<vmem>>, %arg11: memref<1x32xf32, #tpu.memory_space<vmem>>, %arg12: memref<1x32xf32, #tpu.memory_space<vmem>>, %arg13: memref<1x8x32xf32, #tpu.memory_space<vmem>>, %arg14: memref<41x16xf32, #tpu.memory_space<vmem>>, %arg15: memref<19x16xf32, #tpu.memory_space<vmem>>, %arg16: memref<41x80xf32, #tpu.memory_space<vmem>>) attributes {dimension_semantics = [#tpu.dimension_semantics<parallel>, #tpu.dimension_semantics<parallel>], iteration_bounds = array<i64: 2, 2>, scalar_prefetch = 0 : i64, scratch_operands = 3 : i64, tpu.core_type = #tpu.core_type<tc>, window_params = [{transform_indices = @transform_0, window_bounds = array<i64: 1, 1, 85, 16>}, {pipeline_mode = #tpu.pipeline_mode<synchronous>, transform_indices = @transform_1, window_bounds = array<i64: 80, 32>}, {pipeline_mode = #tpu.pipeline_mode<synchronous>, transform_indices = @transform_2, window_bounds = array<i64: 80, 32>}, {pipeline_mode = #tpu.pipeline_mode<synchronous>, transform_indices = @transform_3, window_bounds = array<i64: 80, 64>}, {pipeline_mode = #tpu.pipeline_mode<synchronous>, transform_indices = @transform_4, window_bounds = array<i64: 1, 32>}, {pipeline_mode = #tpu.pipeline_mode<synchronous>, transform_indices = @transform_5, window_bounds = array<i64: 1, 32>}, {pipeline_mode = #tpu.pipeline_mode<synchronous>, transform_indices = @transform_6, window_bounds = array<i64: 1, 64>}, {pipeline_mode = #tpu.pipeline_mode<synchronous>, transform_indices = @transform_7, window_bounds = array<i64: 32, 64>}, {pipeline_mode = #tpu.pipeline_mode<synchronous>, transform_indices = @transform_8, window_bounds = array<i64: 64, 32>}, {pipeline_mode = #tpu.pipeline_mode<synchronous>, transform_indices = @transform_9, window_bounds = array<i64: 1, 32>}, {pipeline_mode = #tpu.pipeline_mode<synchronous>, transform_indices = @transform_10, window_bounds = array<i64: 1, 32>}, {transform_indices = @transform_11, window_bounds = array<i64: 1, 8, 32>}]} {
    %c0 = arith.constant 0 : index
    %c0_0 = arith.constant 0 : index
    %c0_1 = arith.constant 0 : index
    %c0_2 = arith.constant 0 : index
    %0 = tpu.strided_load %arg2[%c0, %c0_0, %c0_1, %c0_2] {strides = array<i32: 1, 1, 2, 1>} : memref<1x1x85x16xf32, #tpu.memory_space<vmem>>, vector<1x1x41x16xf32>
    %1 = vector.shape_cast %0 : vector<1x1x41x16xf32> to vector<41x16xf32>
    %c0_3 = arith.constant 0 : index
    %c0_4 = arith.constant 0 : index
    %2 = vector.load %arg16[%c0_3, %c0_4] : memref<41x80xf32, #tpu.memory_space<vmem>>, vector<41x16xf32>
    tpu.vector_store %arg16[%c0_3, %c0_4], %1 {strides = array<i32>} : memref<41x80xf32, #tpu.memory_space<vmem>>, vector<41x16xf32>,
    %c0_5 = arith.constant 0 : index
    %c0_6 = arith.constant 0 : index
    %c1 = arith.constant 1 : index
    %c0_7 = arith.constant 0 : index
    %3 = tpu.strided_load %arg2[%c0_5, %c0_6, %c1, %c0_7] {strides = array<i32: 1, 1, 2, 1>} : memref<1x1x85x16xf32, #tpu.memory_space<vmem>>, vector<1x1x41x16xf32>
    %4 = vector.shape_cast %3 : vector<1x1x41x16xf32> to vector<41x16xf32>
    %c0_8 = arith.constant 0 : index
    %c16 = arith.constant 16 : index
    %5 = vector.load %arg16[%c0_8, %c16] : memref<41x80xf32, #tpu.memory_space<vmem>>, vector<41x16xf32>
    tpu.vector_store %arg16[%c0_8, %c16], %4 {strides = array<i32>} : memref<41x80xf32, #tpu.memory_space<vmem>>, vector<41x16xf32>,
    %c0_9 = arith.constant 0 : index
    %c0_10 = arith.constant 0 : index
    %c2 = arith.constant 2 : index
    %c0_11 = arith.constant 0 : index
    %6 = tpu.strided_load %arg2[%c0_9, %c0_10, %c2, %c0_11] {strides = array<i32: 1, 1, 2, 1>} : memref<1x1x85x16xf32, #tpu.memory_space<vmem>>, vector<1x1x41x16xf32>
    %7 = vector.shape_cast %6 : vector<1x1x41x16xf32> to vector<41x16xf32>
    %c0_12 = arith.constant 0 : index
    %c32 = arith.constant 32 : index
    %8 = vector.load %arg16[%c0_12, %c32] : memref<41x80xf32, #tpu.memory_space<vmem>>, vector<41x16xf32>
    tpu.vector_store %arg16[%c0_12, %c32], %7 {strides = array<i32>} : memref<41x80xf32, #tpu.memory_space<vmem>>, vector<41x16xf32>,
    %c0_13 = arith.constant 0 : index
    %c0_14 = arith.constant 0 : index
    %c3 = arith.constant 3 : index
    %c0_15 = arith.constant 0 : index
    %9 = tpu.strided_load %arg2[%c0_13, %c0_14, %c3, %c0_15] {strides = array<i32: 1, 1, 2, 1>} : memref<1x1x85x16xf32, #tpu.memory_space<vmem>>, vector<1x1x41x16xf32>
    %10 = vector.shape_cast %9 : vector<1x1x41x16xf32> to vector<41x16xf32>
    %c0_16 = arith.constant 0 : index
    %c48 = arith.constant 48 : index
    %11 = vector.load %arg16[%c0_16, %c48] : memref<41x80xf32, #tpu.memory_space<vmem>>, vector<41x16xf32>
    tpu.vector_store %arg16[%c0_16, %c48], %10 {strides = array<i32>} : memref<41x80xf32, #tpu.memory_space<vmem>>, vector<41x16xf32>,
    %c0_17 = arith.constant 0 : index
    %c0_18 = arith.constant 0 : index
    %c4 = arith.constant 4 : index
    %c0_19 = arith.constant 0 : index
    %12 = tpu.strided_load %arg2[%c0_17, %c0_18, %c4, %c0_19] {strides = array<i32: 1, 1, 2, 1>} : memref<1x1x85x16xf32, #tpu.memory_space<vmem>>, vector<1x1x41x16xf32>
    %13 = vector.shape_cast %12 : vector<1x1x41x16xf32> to vector<41x16xf32>
    %c0_20 = arith.constant 0 : index
    %c64 = arith.constant 64 : index
    %14 = vector.load %arg16[%c0_20, %c64] : memref<41x80xf32, #tpu.memory_space<vmem>>, vector<41x16xf32>
    tpu.vector_store %arg16[%c0_20, %c64], %13 {strides = array<i32>} : memref<41x80xf32, #tpu.memory_space<vmem>>, vector<41x16xf32>,
    %c0_21 = arith.constant 0 : index
    %c0_22 = arith.constant 0 : index
    %15 = vector.load %arg16[%c0_21, %c0_22] : memref<41x80xf32, #tpu.memory_space<vmem>>, vector<41x80xf32>
    %16 = arith.truncf %15 : vector<41x80xf32> to vector<41x80xbf16>
    %c0_23 = arith.constant 0 : index
    %c0_24 = arith.constant 0 : index
    %17 = vector.load %arg3[%c0_23, %c0_24] : memref<80x32xbf16, #tpu.memory_space<vmem>>, vector<80x32xbf16>
    %cst = arith.constant dense<0.000000e+00> : vector<41x32xf32>
    %18 = tpu.matmul %16, %17, %cst {dimension_numbers = #tpu.dot_dimension_numbers<[1], [0], [0], [1], [0, 0, 1, 1], [], []>} : vector<41x80xbf16>, vector<80x32xbf16>, vector<41x32xf32> -> vector<41x32xf32>
    %c0_25 = arith.constant 0 : index
    %c0_26 = arith.constant 0 : index
    %19 = vector.load %arg6[%c0_25, %c0_26] : memref<1x32xf32, #tpu.memory_space<vmem>>, vector<1x32xf32>
    %20 = vector.broadcast %19 : vector<1x32xf32> to vector<41x32xf32>
    %21 = arith.addf %18, %20 : vector<41x32xf32>
    %22 = vector.extract_strided_slice %21 {offsets = [0, 0], sizes = [41, 16], strides = [1, 1]} : vector<41x32xf32> to vector<41x16xf32>
    %23 = vector.extract_strided_slice %21 {offsets = [0, 16], sizes = [41, 16], strides = [1, 1]} : vector<41x32xf32> to vector<41x16xf32>
    %24 = arith.negf %23 : vector<41x16xf32>
    %25 = math.exp %24 : vector<41x16xf32>
    %cst_27 = arith.constant 1.000000e+00 : f32
    %26 = vector.broadcast %cst_27 : f32 to vector<41x16xf32>
    %27 = arith.addf %26, %25 : vector<41x16xf32>
    %28 = arith.divf %26, %27 : vector<41x16xf32>
    %29 = arith.mulf %22, %28 : vector<41x16xf32>
    %c32_i32 = arith.constant 32 : i32
    %30 = arith.muli %arg1, %c32_i32 : i32
    %c-6_i32 = arith.constant -6 : i32
    %31 = arith.addi %30, %c-6_i32 : i32
    %32 = tpu.iota {dimensions = array<i32: 0>} : vector<41x1xi32>
    %33 = vector.broadcast %31 : i32 to vector<41x1xi32>
    %34 = arith.addi %32, %33 : vector<41x1xi32>
    %c0_i32 = arith.constant 0 : i32
    %35 = vector.broadcast %c0_i32 : i32 to vector<41x1xi32>
    %36 = arith.cmpi sge, %34, %35 : vector<41x1xi32>
    %c64_i32 = arith.constant 64 : i32
    %37 = vector.broadcast %c64_i32 : i32 to vector<41x1xi32>
    %38 = arith.cmpi slt, %34, %37 : vector<41x1xi32>
    %39 = arith.andi %36, %38 : vector<41x1xi1>
    %cst_28 = arith.constant 0.000000e+00 : f32
    %40 = vector.shape_cast %39 : vector<41x1xi1> to vector<41x1xi1>
    %41 = vector.broadcast %40 : vector<41x1xi1> to vector<41x16xi1>
    %42 = vector.broadcast %cst_28 : f32 to vector<41x16xf32>
    %43 = arith.select %41, %29, %42 : vector<41x16xi1>, vector<41x16xf32>
    %c0_29 = arith.constant 0 : index
    %c0_30 = arith.constant 0 : index
    %44 = vector.load %arg14[%c0_29, %c0_30] : memref<41x16xf32, #tpu.memory_space<vmem>>, vector<41x16xf32>
    tpu.vector_store %arg14[%c0_29, %c0_30], %43 {strides = array<i32>} : memref<41x16xf32, #tpu.memory_space<vmem>>, vector<41x16xf32>,
    %c0_31 = arith.constant 0 : index
    %c0_32 = arith.constant 0 : index
    %45 = tpu.strided_load %arg14[%c0_31, %c0_32] {strides = array<i32: 2, 1>} : memref<41x16xf32, #tpu.memory_space<vmem>>, vector<19x16xf32>
    %c0_33 = arith.constant 0 : index
    %c0_34 = arith.constant 0 : index
    %46 = vector.load %arg16[%c0_33, %c0_34] : memref<41x80xf32, #tpu.memory_space<vmem>>, vector<19x16xf32>
    tpu.vector_store %arg16[%c0_33, %c0_34], %45 {strides = array<i32>} : memref<41x80xf32, #tpu.memory_space<vmem>>, vector<19x16xf32>,
    %c1_35 = arith.constant 1 : index
    %c0_36 = arith.constant 0 : index
    %47 = tpu.strided_load %arg14[%c1_35, %c0_36] {strides = array<i32: 2, 1>} : memref<41x16xf32, #tpu.memory_space<vmem>>, vector<19x16xf32>
    %c0_37 = arith.constant 0 : index
    %c16_38 = arith.constant 16 : index
    %48 = vector.load %arg16[%c0_37, %c16_38] : memref<41x80xf32, #tpu.memory_space<vmem>>, vector<19x16xf32>
    tpu.vector_store %arg16[%c0_37, %c16_38], %47 {strides = array<i32>} : memref<41x80xf32, #tpu.memory_space<vmem>>, vector<19x16xf32>,
    %c2_39 = arith.constant 2 : index
    %c0_40 = arith.constant 0 : index
    %49 = tpu.strided_load %arg14[%c2_39, %c0_40] {strides = array<i32: 2, 1>} : memref<41x16xf32, #tpu.memory_space<vmem>>, vector<19x16xf32>
    %c0_41 = arith.constant 0 : index
    %c32_42 = arith.constant 32 : index
    %50 = vector.load %arg16[%c0_41, %c32_42] : memref<41x80xf32, #tpu.memory_space<vmem>>, vector<19x16xf32>
    tpu.vector_store %arg16[%c0_41, %c32_42], %49 {strides = array<i32>} : memref<41x80xf32, #tpu.memory_space<vmem>>, vector<19x16xf32>,
    %c3_43 = arith.constant 3 : index
    %c0_44 = arith.constant 0 : index
    %51 = tpu.strided_load %arg14[%c3_43, %c0_44] {strides = array<i32: 2, 1>} : memref<41x16xf32, #tpu.memory_space<vmem>>, vector<19x16xf32>
    %c0_45 = arith.constant 0 : index
    %c48_46 = arith.constant 48 : index
    %52 = vector.load %arg16[%c0_45, %c48_46] : memref<41x80xf32, #tpu.memory_space<vmem>>, vector<19x16xf32>
    tpu.vector_store %arg16[%c0_45, %c48_46], %51 {strides = array<i32>} : memref<41x80xf32, #tpu.memory_space<vmem>>, vector<19x16xf32>,
    %c4_47 = arith.constant 4 : index
    %c0_48 = arith.constant 0 : index
    %53 = tpu.strided_load %arg14[%c4_47, %c0_48] {strides = array<i32: 2, 1>} : memref<41x16xf32, #tpu.memory_space<vmem>>, vector<19x16xf32>
    %c0_49 = arith.constant 0 : index
    %c64_50 = arith.constant 64 : index
    %54 = vector.load %arg16[%c0_49, %c64_50] : memref<41x80xf32, #tpu.memory_space<vmem>>, vector<19x16xf32>
    tpu.vector_store %arg16[%c0_49, %c64_50], %53 {strides = array<i32>} : memref<41x80xf32, #tpu.memory_space<vmem>>, vector<19x16xf32>,
    %c0_51 = arith.constant 0 : index
    %c0_52 = arith.constant 0 : index
    %55 = vector.load %arg16[%c0_51, %c0_52] : memref<41x80xf32, #tpu.memory_space<vmem>>, vector<19x80xf32>
    %56 = arith.truncf %55 : vector<19x80xf32> to vector<19x80xbf16>
    %c0_53 = arith.constant 0 : index
    %c0_54 = arith.constant 0 : index
    %57 = vector.load %arg4[%c0_53, %c0_54] : memref<80x32xbf16, #tpu.memory_space<vmem>>, vector<80x32xbf16>
    %cst_55 = arith.constant dense<0.000000e+00> : vector<19x32xf32>
    %58 = tpu.matmul %56, %57, %cst_55 {dimension_numbers = #tpu.dot_dimension_numbers<[1], [0], [0], [1], [0, 0, 1, 1], [], []>} : vector<19x80xbf16>, vector<80x32xbf16>, vector<19x32xf32> -> vector<19x32xf32>
    %c0_56 = arith.constant 0 : index
    %c0_57 = arith.constant 0 : index
    %59 = vector.load %arg7[%c0_56, %c0_57] : memref<1x32xf32, #tpu.memory_space<vmem>>, vector<1x32xf32>
    %60 = vector.broadcast %59 : vector<1x32xf32> to vector<19x32xf32>
    %61 = arith.addf %58, %60 : vector<19x32xf32>
    %62 = vector.extract_strided_slice %61 {offsets = [0, 0], sizes = [19, 16], strides = [1, 1]} : vector<19x32xf32> to vector<19x16xf32>
    %63 = vector.extract_strided_slice %61 {offsets = [0, 16], sizes = [19, 16], strides = [1, 1]} : vector<19x32xf32> to vector<19x16xf32>
    %64 = arith.negf %63 : vector<19x16xf32>
    %65 = math.exp %64 : vector<19x16xf32>
    %cst_58 = arith.constant 1.000000e+00 : f32
    %66 = vector.broadcast %cst_58 : f32 to vector<19x16xf32>
    %67 = arith.addf %66, %65 : vector<19x16xf32>
    %68 = arith.divf %66, %67 : vector<19x16xf32>
    %69 = arith.mulf %62, %68 : vector<19x16xf32>
    %c16_i32 = arith.constant 16 : i32
    %70 = arith.muli %arg1, %c16_i32 : i32
    %c-2_i32 = arith.constant -2 : i32
    %71 = arith.addi %70, %c-2_i32 : i32
    %72 = tpu.iota {dimensions = array<i32: 0>} : vector<19x1xi32>
    %73 = vector.broadcast %71 : i32 to vector<19x1xi32>
    %74 = arith.addi %72, %73 : vector<19x1xi32>
    %c0_i32_59 = arith.constant 0 : i32
    %75 = vector.broadcast %c0_i32_59 : i32 to vector<19x1xi32>
    %76 = arith.cmpi sge, %74, %75 : vector<19x1xi32>
    %c32_i32_60 = arith.constant 32 : i32
    %77 = vector.broadcast %c32_i32_60 : i32 to vector<19x1xi32>
    %78 = arith.cmpi slt, %74, %77 : vector<19x1xi32>
    %79 = arith.andi %76, %78 : vector<19x1xi1>
    %cst_61 = arith.constant 0.000000e+00 : f32
    %80 = vector.shape_cast %79 : vector<19x1xi1> to vector<19x1xi1>
    %81 = vector.broadcast %80 : vector<19x1xi1> to vector<19x16xi1>
    %82 = vector.broadcast %cst_61 : f32 to vector<19x16xf32>
    %83 = arith.select %81, %69, %82 : vector<19x16xi1>, vector<19x16xf32>
    %c0_62 = arith.constant 0 : index
    %c0_63 = arith.constant 0 : index
    %84 = vector.load %arg15[%c0_62, %c0_63] : memref<19x16xf32, #tpu.memory_space<vmem>>, vector<19x16xf32>
    tpu.vector_store %arg15[%c0_62, %c0_63], %83 {strides = array<i32>} : memref<19x16xf32, #tpu.memory_space<vmem>>, vector<19x16xf32>,
    %c0_64 = arith.constant 0 : index
    %c0_65 = arith.constant 0 : index
    %85 = tpu.strided_load %arg15[%c0_64, %c0_65] {strides = array<i32: 2, 1>} : memref<19x16xf32, #tpu.memory_space<vmem>>, vector<8x16xf32>
    %c0_66 = arith.constant 0 : index
    %c0_67 = arith.constant 0 : index
    %86 = vector.load %arg16[%c0_66, %c0_67] : memref<41x80xf32, #tpu.memory_space<vmem>>, vector<8x16xf32>
    tpu.vector_store %arg16[%c0_66, %c0_67], %85 {strides = array<i32>} : memref<41x80xf32, #tpu.memory_space<vmem>>, vector<8x16xf32>,
    %c1_68 = arith.constant 1 : index
    %c0_69 = arith.constant 0 : index
    %87 = tpu.strided_load %arg15[%c1_68, %c0_69] {strides = array<i32: 2, 1>} : memref<19x16xf32, #tpu.memory_space<vmem>>, vector<8x16xf32>
    %c0_70 = arith.constant 0 : index
    %c16_71 = arith.constant 16 : index
    %88 = vector.load %arg16[%c0_70, %c16_71] : memref<41x80xf32, #tpu.memory_space<vmem>>, vector<8x16xf32>
    tpu.vector_store %arg16[%c0_70, %c16_71], %87 {strides = array<i32>} : memref<41x80xf32, #tpu.memory_space<vmem>>, vector<8x16xf32>,
    %c2_72 = arith.constant 2 : index
    %c0_73 = arith.constant 0 : index
    %89 = tpu.strided_load %arg15[%c2_72, %c0_73] {strides = array<i32: 2, 1>} : memref<19x16xf32, #tpu.memory_space<vmem>>, vector<8x16xf32>
    %c0_74 = arith.constant 0 : index
    %c32_75 = arith.constant 32 : index
    %90 = vector.load %arg16[%c0_74, %c32_75] : memref<41x80xf32, #tpu.memory_space<vmem>>, vector<8x16xf32>
    tpu.vector_store %arg16[%c0_74, %c32_75], %89 {strides = array<i32>} : memref<41x80xf32, #tpu.memory_space<vmem>>, vector<8x16xf32>,
    %c3_76 = arith.constant 3 : index
    %c0_77 = arith.constant 0 : index
    %91 = tpu.strided_load %arg15[%c3_76, %c0_77] {strides = array<i32: 2, 1>} : memref<19x16xf32, #tpu.memory_space<vmem>>, vector<8x16xf32>
    %c0_78 = arith.constant 0 : index
    %c48_79 = arith.constant 48 : index
    %92 = vector.load %arg16[%c0_78, %c48_79] : memref<41x80xf32, #tpu.memory_space<vmem>>, vector<8x16xf32>
    tpu.vector_store %arg16[%c0_78, %c48_79], %91 {strides = array<i32>} : memref<41x80xf32, #tpu.memory_space<vmem>>, vector<8x16xf32>,
    %c4_80 = arith.constant 4 : index
    %c0_81 = arith.constant 0 : index
    %93 = tpu.strided_load %arg15[%c4_80, %c0_81] {strides = array<i32: 2, 1>} : memref<19x16xf32, #tpu.memory_space<vmem>>, vector<8x16xf32>
    %c0_82 = arith.constant 0 : index
    %c64_83 = arith.constant 64 : index
    %94 = vector.load %arg16[%c0_82, %c64_83] : memref<41x80xf32, #tpu.memory_space<vmem>>, vector<8x16xf32>
    tpu.vector_store %arg16[%c0_82, %c64_83], %93 {strides = array<i32>} : memref<41x80xf32, #tpu.memory_space<vmem>>, vector<8x16xf32>,
    %c0_84 = arith.constant 0 : index
    %c0_85 = arith.constant 0 : index
    %95 = vector.load %arg16[%c0_84, %c0_85] : memref<41x80xf32, #tpu.memory_space<vmem>>, vector<8x80xf32>
    %96 = arith.truncf %95 : vector<8x80xf32> to vector<8x80xbf16>
    %c0_86 = arith.constant 0 : index
    %c0_87 = arith.constant 0 : index
    %97 = vector.load %arg5[%c0_86, %c0_87] : memref<80x64xbf16, #tpu.memory_space<vmem>>, vector<80x64xbf16>
    %cst_88 = arith.constant dense<0.000000e+00> : vector<8x64xf32>
    %98 = tpu.matmul %96, %97, %cst_88 {dimension_numbers = #tpu.dot_dimension_numbers<[1], [0], [0], [1], [0, 0, 1, 1], [], []>} : vector<8x80xbf16>, vector<80x64xbf16>, vector<8x64xf32> -> vector<8x64xf32>
    %c0_89 = arith.constant 0 : index
    %c0_90 = arith.constant 0 : index
    %99 = vector.load %arg8[%c0_89, %c0_90] : memref<1x64xf32, #tpu.memory_space<vmem>>, vector<1x64xf32>
    %100 = vector.broadcast %99 : vector<1x64xf32> to vector<8x64xf32>
    %101 = arith.addf %98, %100 : vector<8x64xf32>
    %102 = vector.extract_strided_slice %101 {offsets = [0, 0], sizes = [8, 32], strides = [1, 1]} : vector<8x64xf32> to vector<8x32xf32>
    %103 = vector.extract_strided_slice %101 {offsets = [0, 32], sizes = [8, 32], strides = [1, 1]} : vector<8x64xf32> to vector<8x32xf32>
    %104 = arith.negf %103 : vector<8x32xf32>
    %105 = math.exp %104 : vector<8x32xf32>
    %cst_91 = arith.constant 1.000000e+00 : f32
    %106 = vector.broadcast %cst_91 : f32 to vector<8x32xf32>
    %107 = arith.addf %106, %105 : vector<8x32xf32>
    %108 = arith.divf %106, %107 : vector<8x32xf32>
    %109 = arith.mulf %102, %108 : vector<8x32xf32>
    %110 = arith.truncf %109 : vector<8x32xf32> to vector<8x32xbf16>
    %c0_92 = arith.constant 0 : index
    %c0_93 = arith.constant 0 : index
    %111 = vector.load %arg9[%c0_92, %c0_93] : memref<32x64xbf16, #tpu.memory_space<vmem>>, vector<32x64xbf16>
    %cst_94 = arith.constant dense<0.000000e+00> : vector<8x64xf32>
    %112 = tpu.matmul %110, %111, %cst_94 {dimension_numbers = #tpu.dot_dimension_numbers<[1], [0], [0], [1], [0, 0, 1, 1], [], []>} : vector<8x32xbf16>, vector<32x64xbf16>, vector<8x64xf32> -> vector<8x64xf32>
    %cst_95 = arith.constant 5.000000e-01 : f32
    %113 = vector.broadcast %cst_95 : f32 to vector<8x64xf32>
    %114 = arith.mulf %113, %112 : vector<8x64xf32>
    %cst_96 = arith.constant 0.707106769 : f32
    %115 = vector.broadcast %cst_96 : f32 to vector<8x64xf32>
    %116 = arith.mulf %112, %115 : vector<8x64xf32>
    %117 = math.absf %116 : vector<8x64xf32>
    %cst_97 = arith.constant 5.000000e-01 : f32
    %118 = vector.broadcast %cst_97 : f32 to vector<8x64xf32>
    %119 = arith.mulf %118, %117 : vector<8x64xf32>
    %cst_98 = arith.constant 1.000000e+00 : f32
    %120 = vector.broadcast %cst_98 : f32 to vector<8x64xf32>
    %121 = arith.addf %120, %119 : vector<8x64xf32>
    %122 = tpu.reciprocal %121 {approx = true} : vector<8x64xf32> -> vector<8x64xf32>
    %cst_99 = arith.constant 0.170872763 : f32
    %123 = vector.broadcast %cst_99 : f32 to vector<8x64xf32>
    %124 = arith.mulf %122, %123 : vector<8x64xf32>
    %cst_100 = arith.constant -0.822152256 : f32
    %125 = vector.broadcast %cst_100 : f32 to vector<8x64xf32>
    %126 = arith.addf %125, %124 : vector<8x64xf32>
    %127 = arith.mulf %122, %126 : vector<8x64xf32>
    %cst_101 = arith.constant 1.48851585 : f32
    %128 = vector.broadcast %cst_101 : f32 to vector<8x64xf32>
    %129 = arith.addf %128, %127 : vector<8x64xf32>
    %130 = arith.mulf %122, %129 : vector<8x64xf32>
    %cst_102 = arith.constant -1.13520396 : f32
    %131 = vector.broadcast %cst_102 : f32 to vector<8x64xf32>
    %132 = arith.addf %131, %130 : vector<8x64xf32>
    %133 = arith.mulf %122, %132 : vector<8x64xf32>
    %cst_103 = arith.constant 0.278868079 : f32
    %134 = vector.broadcast %cst_103 : f32 to vector<8x64xf32>
    %135 = arith.addf %134, %133 : vector<8x64xf32>
    %136 = arith.mulf %122, %135 : vector<8x64xf32>
    %cst_104 = arith.constant -0.186288059 : f32
    %137 = vector.broadcast %cst_104 : f32 to vector<8x64xf32>
    %138 = arith.addf %137, %136 : vector<8x64xf32>
    %139 = arith.mulf %122, %138 : vector<8x64xf32>
    %cst_105 = arith.constant 0.0967841818 : f32
    %140 = vector.broadcast %cst_105 : f32 to vector<8x64xf32>
    %141 = arith.addf %140, %139 : vector<8x64xf32>
    %142 = arith.mulf %122, %141 : vector<8x64xf32>
    %cst_106 = arith.constant 0.374091953 : f32
    %143 = vector.broadcast %cst_106 : f32 to vector<8x64xf32>
    %144 = arith.addf %143, %142 : vector<8x64xf32>
    %145 = arith.mulf %122, %144 : vector<8x64xf32>
    %cst_107 = arith.constant 1.00002372 : f32
    %146 = vector.broadcast %cst_107 : f32 to vector<8x64xf32>
    %147 = arith.addf %146, %145 : vector<8x64xf32>
    %148 = arith.mulf %122, %147 : vector<8x64xf32>
    %cst_108 = arith.constant -1.26551223 : f32
    %149 = vector.broadcast %cst_108 : f32 to vector<8x64xf32>
    %150 = arith.addf %149, %148 : vector<8x64xf32>
    %cst_109 = arith.constant 0.000000e+00 : f32
    %151 = vector.broadcast %cst_109 : f32 to vector<8x64xf32>
    %152 = arith.subf %151, %117 : vector<8x64xf32>
    %153 = arith.mulf %152, %117 : vector<8x64xf32>
    %154 = arith.addf %153, %150 : vector<8x64xf32>
    %155 = math.exp %154 : vector<8x64xf32>
    %156 = arith.mulf %122, %155 : vector<8x64xf32>
    %cst_110 = arith.constant 1.000000e+00 : f32
    %157 = vector.broadcast %cst_110 : f32 to vector<8x64xf32>
    %158 = arith.subf %157, %156 : vector<8x64xf32>
    %cst_111 = arith.constant 0.000000e+00 : f32
    %159 = vector.broadcast %cst_111 : f32 to vector<8x64xf32>
    %160 = arith.cmpf oge, %116, %159 : vector<8x64xf32>
    %cst_112 = arith.constant 0.000000e+00 : f32
    %161 = vector.broadcast %cst_112 : f32 to vector<8x64xf32>
    %162 = arith.subf %161, %158 : vector<8x64xf32>
    %163 = arith.select %160, %158, %162 : vector<8x64xi1>, vector<8x64xf32>
    %cst_113 = arith.constant 1.000000e+00 : f32
    %164 = vector.broadcast %cst_113 : f32 to vector<8x64xf32>
    %165 = arith.addf %164, %163 : vector<8x64xf32>
    %166 = arith.mulf %114, %165 : vector<8x64xf32>
    %167 = arith.truncf %166 : vector<8x64xf32> to vector<8x64xbf16>
    %c0_114 = arith.constant 0 : index
    %c0_115 = arith.constant 0 : index
    %168 = vector.load %arg10[%c0_114, %c0_115] : memref<64x32xbf16, #tpu.memory_space<vmem>>, vector<64x32xbf16>
    %cst_116 = arith.constant dense<0.000000e+00> : vector<8x32xf32>
    %169 = tpu.matmul %167, %168, %cst_116 {dimension_numbers = #tpu.dot_dimension_numbers<[1], [0], [0], [1], [0, 0, 1, 1], [], []>} : vector<8x64xbf16>, vector<64x32xbf16>, vector<8x32xf32> -> vector<8x32xf32>
    %170 = arith.addf %169, %109 : vector<8x32xf32>
    %cst_117 = arith.constant dense<0.000000e+00> : vector<8xf32>
    %171 = vector.multi_reduction <add>, %170, %cst_117 [1] : vector<8x32xf32> to vector<8xf32>
    %172 = vector.shape_cast %171 : vector<8xf32> to vector<8x1xf32>
    %cst_118 = arith.constant 3.200000e+01 : f32
    %173 = vector.broadcast %cst_118 : f32 to vector<8x1xf32>
    %174 = arith.divf %172, %173 : vector<8x1xf32>
    %175 = vector.broadcast %174 : vector<8x1xf32> to vector<8x32xf32>
    %176 = arith.subf %170, %175 : vector<8x32xf32>
    %177 = arith.mulf %176, %176 : vector<8x32xf32>
    %cst_119 = arith.constant dense<0.000000e+00> : vector<8xf32>
    %178 = vector.multi_reduction <add>, %177, %cst_119 [1] : vector<8x32xf32> to vector<8xf32>
    %179 = vector.shape_cast %178 : vector<8xf32> to vector<8x1xf32>
    %cst_120 = arith.constant 3.200000e+01 : f32
    %180 = vector.broadcast %cst_120 : f32 to vector<8x1xf32>
    %181 = arith.divf %179, %180 : vector<8x1xf32>
    %cst_121 = arith.constant 9.99999974E-6 : f32
    %182 = vector.broadcast %cst_121 : f32 to vector<8x1xf32>
    %183 = arith.addf %181, %182 : vector<8x1xf32>
    %184 = math.rsqrt %183 : vector<8x1xf32>
    %185 = vector.broadcast %184 : vector<8x1xf32> to vector<8x32xf32>
    %186 = arith.mulf %176, %185 : vector<8x32xf32>
    %c0_122 = arith.constant 0 : index
    %c0_123 = arith.constant 0 : index
    %187 = vector.load %arg11[%c0_122, %c0_123] : memref<1x32xf32, #tpu.memory_space<vmem>>, vector<1x32xf32>
    %188 = vector.broadcast %187 : vector<1x32xf32> to vector<8x32xf32>
    %189 = arith.mulf %186, %188 : vector<8x32xf32>
    %c0_124 = arith.constant 0 : index
    %c0_125 = arith.constant 0 : index
    %190 = vector.load %arg12[%c0_124, %c0_125] : memref<1x32xf32, #tpu.memory_space<vmem>>, vector<1x32xf32>
    %191 = vector.broadcast %190 : vector<1x32xf32> to vector<8x32xf32>
    %192 = arith.addf %189, %191 : vector<8x32xf32>
    %c0_126 = arith.constant 0 : index
    %c0_127 = arith.constant 0 : index
    %c0_128 = arith.constant 0 : index
    %193 = vector.load %arg13[%c0_126, %c0_127, %c0_128] : memref<1x8x32xf32, #tpu.memory_space<vmem>>, vector<1x8x32xf32>
    %194 = vector.shape_cast %193 : vector<1x8x32xf32> to vector<8x32xf32>
    %195 = vector.shape_cast %192 : vector<8x32xf32> to vector<1x8x32xf32>
    tpu.vector_store %arg13[%c0_126, %c0_127, %c0_128], %195 {strides = array<i32>} : memref<1x8x32xf32, #tpu.memory_space<vmem>>, vector<1x8x32xf32>,
    return
  }
  func.func @transform_0(%arg0: i32, %arg1: i32) -> (i32, i32, i32, i32) {
    %c0_i32 = arith.constant 0 : i32
    %c0_i32_0 = arith.constant 0 : i32
    %c0_i32_1 = arith.constant 0 : i32
    return %arg0, %arg1, %c0_i32, %c0_i32_0 : i32, i32, i32, i32
  }
  func.func @transform_1(%arg0: i32, %arg1: i32) -> (i32, i32) {
    %c0_i32 = arith.constant 0 : i32
    %c0_i32_0 = arith.constant 0 : i32
    %c0_i32_1 = arith.constant 0 : i32
    return %c0_i32, %c0_i32_0 : i32, i32
  }
  func.func @transform_2(%arg0: i32, %arg1: i32) -> (i32, i32) {
    %c0_i32 = arith.constant 0 : i32
    %c0_i32_0 = arith.constant 0 : i32
    %c0_i32_1 = arith.constant 0 : i32
    return %c0_i32, %c0_i32_0 : i32, i32
  }
  func.func @transform_3(%arg0: i32, %arg1: i32) -> (i32, i32) {
    %c0_i32 = arith.constant 0 : i32
    %c0_i32_0 = arith.constant 0 : i32
    %c0_i32_1 = arith.constant 0 : i32
    return %c0_i32, %c0_i32_0 : i32, i32
  }
  func.func @transform_4(%arg0: i32, %arg1: i32) -> (i32, i32) {
    %c0_i32 = arith.constant 0 : i32
    %c0_i32_0 = arith.constant 0 : i32
    %c0_i32_1 = arith.constant 0 : i32
    return %c0_i32, %c0_i32_0 : i32, i32
  }
  func.func @transform_5(%arg0: i32, %arg1: i32) -> (i32, i32) {
    %c0_i32 = arith.constant 0 : i32
    %c0_i32_0 = arith.constant 0 : i32
    %c0_i32_1 = arith.constant 0 : i32
    return %c0_i32, %c0_i32_0 : i32, i32
  }
  func.func @transform_6(%arg0: i32, %arg1: i32) -> (i32, i32) {
    %c0_i32 = arith.constant 0 : i32
    %c0_i32_0 = arith.constant 0 : i32
    %c0_i32_1 = arith.constant 0 : i32
    return %c0_i32, %c0_i32_0 : i32, i32
  }
  func.func @transform_7(%arg0: i32, %arg1: i32) -> (i32, i32) {
    %c0_i32 = arith.constant 0 : i32
    %c0_i32_0 = arith.constant 0 : i32
    %c0_i32_1 = arith.constant 0 : i32
    return %c0_i32, %c0_i32_0 : i32, i32
  }
  func.func @transform_8(%arg0: i32, %arg1: i32) -> (i32, i32) {
    %c0_i32 = arith.constant 0 : i32
    %c0_i32_0 = arith.constant 0 : i32
    %c0_i32_1 = arith.constant 0 : i32
    return %c0_i32, %c0_i32_0 : i32, i32
  }
  func.func @transform_9(%arg0: i32, %arg1: i32) -> (i32, i32) {
    %c0_i32 = arith.constant 0 : i32
    %c0_i32_0 = arith.constant 0 : i32
    %c0_i32_1 = arith.constant 0 : i32
    return %c0_i32, %c0_i32_0 : i32, i32
  }
  func.func @transform_10(%arg0: i32, %arg1: i32) -> (i32, i32) {
    %c0_i32 = arith.constant 0 : i32
    %c0_i32_0 = arith.constant 0 : i32
    %c0_i32_1 = arith.constant 0 : i32
    return %c0_i32, %c0_i32_0 : i32, i32
  }
  func.func @transform_11(%arg0: i32, %arg1: i32) -> (i32, i32, i32) {
    %c0_i32 = arith.constant 0 : i32
    %c0_i32_0 = arith.constant 0 : i32
    return %arg0, %arg1, %c0_i32 : i32, i32, i32
  }
}

</mosaic_0001>

<llo_original>
// kernel: _lambda_.1
$region0: #{_lambda_.1}
  #allocation0 [shape = 'u32[]', space=smem, size = 0x4, offset = 0x4, fixed_abs, tag = 'smem constant byte address 0x4 - core index']
  #allocation1 [shape = 'u32[144,128]{1,0:T(1,128)}', space=vmem, size = 0x12000, scoped, tag = 'internal scratch']
  #allocation2 [shape = 'f32[41,16]{1,0:T(8,128)}', space=vmem, size = 0x6000, scoped, tag = 'scratch operand']
  #allocation3 [shape = 'f32[19,16]{1,0:T(8,128)}', space=vmem, size = 0x3000, scoped, tag = 'scratch operand']
  #allocation4 [shape = 'f32[41,80]{1,0:T(8,128)}', space=vmem, size = 0x6000, scoped, tag = 'scratch operand']
  %s0 = inlined_call_operand.vmem [shape: f32[2,2,85,16], index: 0, kind: input, shape index: {}]
  %s1 = inlined_call_operand.vmem [shape: bf16[80,32], index: 1, kind: input, shape index: {}]
  %s2 = inlined_call_operand.vmem [shape: bf16[80,32], index: 2, kind: input, shape index: {}]
  %s3 = inlined_call_operand.vmem [shape: bf16[80,64], index: 3, kind: input, shape index: {}]
  %s4 = inlined_call_operand.vmem [shape: f32[1,32], index: 4, kind: input, shape index: {}]
  %s5 = inlined_call_operand.vmem [shape: f32[1,32], index: 5, kind: input, shape index: {}]
  %s6 = inlined_call_operand.vmem [shape: f32[1,64], index: 6, kind: input, shape index: {}]
  %s7 = inlined_call_operand.vmem [shape: bf16[32,64], index: 7, kind: input, shape index: {}]
  %s8 = inlined_call_operand.vmem [shape: bf16[64,32], index: 8, kind: input, shape index: {}]
  %s9 = inlined_call_operand.vmem [shape: f32[1,32], index: 9, kind: input, shape index: {}]
  %s10 = inlined_call_operand.vmem [shape: f32[1,32], index: 10, kind: input, shape index: {}]
  %s11 = inlined_call_operand.hbm [shape: f32[2,16,32], index: 11, kind: output, shape index: {}]
  %s12 = sld [smem:[#allocation0]]
  $region77: #{_lambda_.1} parent=0
    _
  %s14 = ssub.s32 1, %s12
  %s15 = scalar_select 0, %s14, %s12
  $region1: #{_lambda_.1} parent=0
    #allocation5 [shape = 'u8[8192]{0}', space=vmem, size = 0x2000, scoped, tag = 'output window, operand 0']
    #allocation6 [shape = 's32[2]{0}', space=sflag, size = 0x8, scoped, tag = 'scoped memory for _lambda_.1']
    %16 = vsyncpa [#allocation6], 0
    %s17 = scalar_lea.sflag [#allocation6], 1
    %18 = vsyncpa %s17, 0
    loop: start=0, step=1, limit=6
    $region2: #{_lambda_.1} parent=1 // loop_pre_header
      _
    $region3: #{_lambda_.1} parent=1 // loop_header
      %s20 = sphi 0, %s24
      %p21 = scmp.ge.s32.totalorder %s20, 6
      %s27 = sphi 0, %s39
      %s28 = sphi 0, %s35
      %s29 = sphi 0, %s27
      %s30 = sphi 0, %s28
      %s31 = sphi 0, %s29
      %s32 = sphi 0, %s30
      %s44 = sphi 0, %s46
      %s47 = sphi 0, %s44
      %s48 = sphi 0, %s47
      %s64 = sphi 0, %s48
      %s68 = sphi 0, %s68
      %s70 = sphi 0, %s68
      %s71 = sphi 0, %s70
      %s85 = sphi 0, %s71
      %s89 = sphi 0, %s89
      %s91 = sphi 0, %s89
      %s92 = sphi 0, %s91
      %s106 = sphi 0, %s92
      %s110 = sphi 0, %s110
      %s112 = sphi 0, %s110
      %s113 = sphi 0, %s112
      %s127 = sphi 0, %s113
      %s131 = sphi 0, %s131
      %s133 = sphi 0, %s131
      %s134 = sphi 0, %s133
      %s148 = sphi 0, %s134
      %s152 = sphi 0, %s152
      %s154 = sphi 0, %s152
      %s155 = sphi 0, %s154
      %s169 = sphi 0, %s155
      %s173 = sphi 0, %s173
      %s175 = sphi 0, %s173
      %s176 = sphi 0, %s175
      %s190 = sphi 0, %s176
      %s194 = sphi 0, %s194
      %s196 = sphi 0, %s194
      %s197 = sphi 0, %s196
      %s211 = sphi 0, %s197
      %s215 = sphi 0, %s215
      %s217 = sphi 0, %s215
      %s218 = sphi 0, %s217
      %s232 = sphi 0, %s218
      %s236 = sphi 0, %s236
      %s238 = sphi 0, %s236
      %s239 = sphi 0, %s238
      %s253 = sphi 0, %s239
      %s257 = sphi 0, %s257
      %s259 = sphi 0, %s257
      %s260 = sphi 0, %s259
      %s274 = sphi 0, %s260
      %s282 = sphi 0, %s284
      %s285 = sphi 0, %s282
      %s286 = sphi 0, %s285
      %s302 = sphi 0, %s286
    $region4: #{_lambda_.1} parent=1 // loop_header_branch
      %23 = sbr.rel (%p21) target = $region8
    $region5: #{_lambda_.1} parent=1 // loop_body
      %s25 = ssub.s32 %s20, 1
      %s26 = ssub.s32 %s20, 2
      %s33 = sadd.s32 1, %s28
      %p34 = scmp.ge.s32.totalorder %s33, 2
      %s35 = scalar_select %p34, 0, %s33
      %s36 = sadd.s32 1, %s27
      %s37 = scalar_select %p34, %s36, %s27
      %p38 = scmp.ge.s32.totalorder %s37, 2
      %s39 = scalar_select %p38, 0, %s37
      %s40 = ssub.s32 %s27, %s39
      %s41 = ssub.s32 %s28, %s35
      %s42 = sor.u32 %s40, %s41
      %p43 = scmp.eq.s32.totalorder %s42, 0
      %s45 = sadd.s32 %s44, 1
      %s46 = scalar_select %p43, %s44, %s45
      %p49 = pneg %p43
      %p50 = scmp.eq.s32.totalorder %s20, 3
      %p51 = por %p49, %p50
      %p52 = scmp.ne.s32.totalorder %s44, %s47
      %p53 = scmp.eq.s32.totalorder %s20, 0
      %p54 = por %p52, %p53
      %p55 = scmp.ne.s32.totalorder %s44, %s47
      %p56 = scmp.eq.s32.totalorder %s25, 3
      %p57 = por %p55, %p56
      %p58 = scmp.ne.s32.totalorder %s47, %s48
      %p59 = scmp.eq.s32.totalorder %s25, 0
      %p60 = por %p58, %p59
      %p61 = scmp.ne.s32.totalorder %s47, %s48
      %p62 = scmp.eq.s32.totalorder %s26, 3
      %p63 = por %p61, %p62
      %p65 = scmp.ne.s32.totalorder %s48, %s64
      %p66 = scmp.eq.s32.totalorder %s26, 0
      %p67 = por %p65, %p66
      %s69 = sadd.s32 %s68, 1
      %p72 = scmp.eq.s32.totalorder %s20, 3
      %p73 = scmp.ne.s32.totalorder %s68, %s70
      %p74 = scmp.eq.s32.totalorder %s20, 0
      %p75 = por %p73, %p74
      %p76 = scmp.ne.s32.totalorder %s68, %s70
      %p77 = scmp.eq.s32.totalorder %s25, 3
      %p78 = por %p76, %p77
      %p79 = scmp.ne.s32.totalorder %s70, %s71
      %p80 = scmp.eq.s32.totalorder %s25, 0
      %p81 = por %p79, %p80
      %p82 = scmp.ne.s32.totalorder %s70, %s71
      %p83 = scmp.eq.s32.totalorder %s26, 3
      %p84 = por %p82, %p83
      %p86 = scmp.ne.s32.totalorder %s71, %s85
      %p87 = scmp.eq.s32.totalorder %s26, 0
      %p88 = por %p86, %p87
      %s90 = sadd.s32 %s89, 1
      %p93 = scmp.eq.s32.totalorder %s20, 3
      %p94 = scmp.ne.s32.totalorder %s89, %s91
      %p95 = scmp.eq.s32.totalorder %s20, 0
      %p96 = por %p94, %p95
      %p97 = scmp.ne.s32.totalorder %s89, %s91
      %p98 = scmp.eq.s32.totalorder %s25, 3
      %p99 = por %p97, %p98
      %p100 = scmp.ne.s32.totalorder %s91, %s92
      %p101 = scmp.eq.s32.totalorder %s25, 0
      %p102 = por %p100, %p101
      %p103 = scmp.ne.s32.totalorder %s91, %s92
      %p104 = scmp.eq.s32.totalorder %s26, 3
      %p105 = por %p103, %p104
      %p107 = scmp.ne.s32.totalorder %s92, %s106
      %p108 = scmp.eq.s32.totalorder %s26, 0
      %p109 = por %p107, %p108
      %s111 = sadd.s32 %s110, 1
      %p114 = scmp.eq.s32.totalorder %s20, 3
      %p115 = scmp.ne.s32.totalorder %s110, %s112
      %p116 = scmp.eq.s32.totalorder %s20, 0
      %p117 = por %p115, %p116
      %p118 = scmp.ne.s32.totalorder %s110, %s112
      %p119 = scmp.eq.s32.totalorder %s25, 3
      %p120 = por %p118, %p119
      %p121 = scmp.ne.s32.totalorder %s112, %s113
      %p122 = scmp.eq.s32.totalorder %s25, 0
      %p123 = por %p121, %p122
      %p124 = scmp.ne.s32.totalorder %s112, %s113
      %p125 = scmp.eq.s32.totalorder %s26, 3
      %p126 = por %p124, %p125
      %p128 = scmp.ne.s32.totalorder %s113, %s127
      %p129 = scmp.eq.s32.totalorder %s26, 0
      %p130 = por %p128, %p129
      %s132 = sadd.s32 %s131, 1
      %p135 = scmp.eq.s32.totalorder %s20, 3
      %p136 = scmp.ne.s32.totalorder %s131, %s133
      %p137 = scmp.eq.s32.totalorder %s20, 0
      %p138 = por %p136, %p137
      %p139 = scmp.ne.s32.totalorder %s131, %s133
      %p140 = scmp.eq.s32.totalorder %s25, 3
      %p141 = por %p139, %p140
      %p142 = scmp.ne.s32.totalorder %s133, %s134
      %p143 = scmp.eq.s32.totalorder %s25, 0
      %p144 = por %p142, %p143
      %p145 = scmp.ne.s32.totalorder %s133, %s134
      %p146 = scmp.eq.s32.totalorder %s26, 3
      %p147 = por %p145, %p146
      %p149 = scmp.ne.s32.totalorder %s134, %s148
      %p150 = scmp.eq.s32.totalorder %s26, 0
      %p151 = por %p149, %p150
      %s153 = sadd.s32 %s152, 1
      %p156 = scmp.eq.s32.totalorder %s20, 3
      %p157 = scmp.ne.s32.totalorder %s152, %s154
      %p158 = scmp.eq.s32.totalorder %s20, 0
      %p159 = por %p157, %p158
      %p160 = scmp.ne.s32.totalorder %s152, %s154
      %p161 = scmp.eq.s32.totalorder %s25, 3
      %p162 = por %p160, %p161
      %p163 = scmp.ne.s32.totalorder %s154, %s155
      %p164 = scmp.eq.s32.totalorder %s25, 0
      %p165 = por %p163, %p164
      %p166 = scmp.ne.s32.totalorder %s154, %s155
      %p167 = scmp.eq.s32.totalorder %s26, 3
      %p168 = por %p166, %p167
      %p170 = scmp.ne.s32.totalorder %s155, %s169
      %p171 = scmp.eq.s32.totalorder %s26, 0
      %p172 = por %p170, %p171
      %s174 = sadd.s32 %s173, 1
      %p177 = scmp.eq.s32.totalorder %s20, 3
      %p178 = scmp.ne.s32.totalorder %s173, %s175
      %p179 = scmp.eq.s32.totalorder %s20, 0
      %p180 = por %p178, %p179
      %p181 = scmp.ne.s32.totalorder %s173, %s175
      %p182 = scmp.eq.s32.totalorder %s25, 3
      %p183 = por %p181, %p182
      %p184 = scmp.ne.s32.totalorder %s175, %s176
      %p185 = scmp.eq.s32.totalorder %s25, 0
      %p186 = por %p184, %p185
      %p187 = scmp.ne.s32.totalorder %s175, %s176
      %p188 = scmp.eq.s32.totalorder %s26, 3
      %p189 = por %p187, %p188
      %p191 = scmp.ne.s32.totalorder %s176, %s190
      %p192 = scmp.eq.s32.totalorder %s26, 0
      %p193 = por %p191, %p192
      %s195 = sadd.s32 %s194, 1
      %p198 = scmp.eq.s32.totalorder %s20, 3
      %p199 = scmp.ne.s32.totalorder %s194, %s196
      %p200 = scmp.eq.s32.totalorder %s20, 0
      %p201 = por %p199, %p200
      %p202 = scmp.ne.s32.totalorder %s194, %s196
      %p203 = scmp.eq.s32.totalorder %s25, 3
      %p204 = por %p202, %p203
      %p205 = scmp.ne.s32.totalorder %s196, %s197
      %p206 = scmp.eq.s32.totalorder %s25, 0
      %p207 = por %p205, %p206
      %p208 = scmp.ne.s32.totalorder %s196, %s197
      %p209 = scmp.eq.s32.totalorder %s26, 3
      %p210 = por %p208, %p209
      %p212 = scmp.ne.s32.totalorder %s197, %s211
      %p213 = scmp.eq.s32.totalorder %s26, 0
      %p214 = por %p212, %p213
      %s216 = sadd.s32 %s215, 1
      %p219 = scmp.eq.s32.totalorder %s20, 3
      %p220 = scmp.ne.s32.totalorder %s215, %s217
      %p221 = scmp.eq.s32.totalorder %s20, 0
      %p222 = por %p220, %p221
      %p223 = scmp.ne.s32.totalorder %s215, %s217
      %p224 = scmp.eq.s32.totalorder %s25, 3
      %p225 = por %p223, %p224
      %p226 = scmp.ne.s32.totalorder %s217, %s218
      %p227 = scmp.eq.s32.totalorder %s25, 0
      %p228 = por %p226, %p227
      %p229 = scmp.ne.s32.totalorder %s217, %s218
      %p230 = scmp.eq.s32.totalorder %s26, 3
      %p231 = por %p229, %p230
      %p233 = scmp.ne.s32.totalorder %s218, %s232
      %p234 = scmp.eq.s32.totalorder %s26, 0
      %p235 = por %p233, %p234
      %s237 = sadd.s32 %s236, 1
      %p240 = scmp.eq.s32.totalorder %s20, 3
      %p241 = scmp.ne.s32.totalorder %s236, %s238
      %p242 = scmp.eq.s32.totalorder %s20, 0
      %p243 = por %p241, %p242
      %p244 = scmp.ne.s32.totalorder %s236, %s238
      %p245 = scmp.eq.s32.totalorder %s25, 3
      %p246 = por %p244, %p245
      %p247 = scmp.ne.s32.totalorder %s238, %s239
      %p248 = scmp.eq.s32.totalorder %s25, 0
      %p249 = por %p247, %p248
      %p250 = scmp.ne.s32.totalorder %s238, %s239
      %p251 = scmp.eq.s32.totalorder %s26, 3
      %p252 = por %p250, %p251
      %p254 = scmp.ne.s32.totalorder %s239, %s253
      %p255 = scmp.eq.s32.totalorder %s26, 0
      %p256 = por %p254, %p255
      %s258 = sadd.s32 %s257, 1
      %p261 = scmp.eq.s32.totalorder %s20, 3
      %p262 = scmp.ne.s32.totalorder %s257, %s259
      %p263 = scmp.eq.s32.totalorder %s20, 0
      %p264 = por %p262, %p263
      %p265 = scmp.ne.s32.totalorder %s257, %s259
      %p266 = scmp.eq.s32.totalorder %s25, 3
      %p267 = por %p265, %p266
      %p268 = scmp.ne.s32.totalorder %s259, %s260
      %p269 = scmp.eq.s32.totalorder %s25, 0
      %p270 = por %p268, %p269
      %p271 = scmp.ne.s32.totalorder %s259, %s260
      %p272 = scmp.eq.s32.totalorder %s26, 3
      %p273 = por %p271, %p272
      %p275 = scmp.ne.s32.totalorder %s260, %s274
      %p276 = scmp.eq.s32.totalorder %s26, 0
      %p277 = por %p275, %p276
      %s278 = ssub.s32 %s27, %s39
      %s279 = ssub.s32 %s28, %s35
      %s280 = sor.u32 %s278, %s279
      %p281 = scmp.eq.s32.totalorder %s280, 0
      %s283 = sadd.s32 %s282, 1
      %s284 = scalar_select %p281, %s282, %s283
      %p287 = pneg %p281
      %p288 = scmp.eq.s32.totalorder %s20, 3
      %p289 = por %p287, %p288
      %p290 = scmp.ne.s32.totalorder %s282, %s285
      %p291 = scmp.eq.s32.totalorder %s20, 0
      %p292 = por %p290, %p291
      %p293 = scmp.ne.s32.totalorder %s282, %s285
      %p294 = scmp.eq.s32.totalorder %s25, 3
      %p295 = por %p293, %p294
      %p296 = scmp.ne.s32.totalorder %s285, %s286
      %p297 = scmp.eq.s32.totalorder %s25, 0
      %p298 = por %p296, %p297
      %p299 = scmp.ne.s32.totalorder %s285, %s286
      %p300 = scmp.eq.s32.totalorder %s26, 3
      %p301 = por %p299, %p300
      %p303 = scmp.ne.s32.totalorder %s286, %s302
      %p304 = scmp.eq.s32.totalorder %s26, 0
      %p305 = por %p303, %p304
      %p306 = scmp.le.s32.totalorder 1, %s20
      %p307 = scmp.lt.s32.totalorder %s20, 5
      %p308 = pnand %p306, %p307
      %p309 = pneg %p308
      // Predicated region
      $region9: #{_lambda_.1} parent=5 // pred_check
        _
      $region10: #{_lambda_.1} parent=5 // pred_check_branch
        %311 = sbr.rel (%p308) target = $region12
      $region11: #{_lambda_.1} parent=5 // pred_region
        %s312 = ssub.s32 %s20, 1
        // Predicated region
        $region13: #{_lambda_.1} parent=11 // pred_check
          %p313 = pneg %p81
        $region14: #{_lambda_.1} parent=11 // pred_check_branch
          %315 = sbr.rel (%p313) target = $region16
        $region15: #{_lambda_.1} parent=11 // pred_region
          _
        $region16: #{_lambda_.1} parent=11 // pred_fallthru
          _
        // Predicated region
        $region17: #{_lambda_.1} parent=11 // pred_check
          %p316 = pneg %p102
        $region18: #{_lambda_.1} parent=11 // pred_check_branch
          %318 = sbr.rel (%p316) target = $region20
        $region19: #{_lambda_.1} parent=11 // pred_region
          _
        $region20: #{_lambda_.1} parent=11 // pred_fallthru
          _
        // Predicated region
        $region21: #{_lambda_.1} parent=11 // pred_check
          %p319 = pneg %p123
        $region22: #{_lambda_.1} parent=11 // pred_check_branch
          %321 = sbr.rel (%p319) target = $region24
        $region23: #{_lambda_.1} parent=11 // pred_region
          _
        $region24: #{_lambda_.1} parent=11 // pred_fallthru
          _
        // Predicated region
        $region25: #{_lambda_.1} parent=11 // pred_check
          %p322 = pneg %p144
        $region26: #{_lambda_.1} parent=11 // pred_check_branch
          %324 = sbr.rel (%p322) target = $region28
        $region27: #{_lambda_.1} parent=11 // pred_region
          _
        $region28: #{_lambda_.1} parent=11 // pred_fallthru
          _
        // Predicated region
        $region29: #{_lambda_.1} parent=11 // pred_check
          %p325 = pneg %p165
        $region30: #{_lambda_.1} parent=11 // pred_check_branch
          %327 = sbr.rel (%p325) target = $region32
        $region31: #{_lambda_.1} parent=11 // pred_region
          _
        $region32: #{_lambda_.1} parent=11 // pred_fallthru
          _
        // Predicated region
        $region33: #{_lambda_.1} parent=11 // pred_check
          %p328 = pneg %p186
        $region34: #{_lambda_.1} parent=11 // pred_check_branch
          %330 = sbr.rel (%p328) target = $region36
        $region35: #{_lambda_.1} parent=11 // pred_region
          _
        $region36: #{_lambda_.1} parent=11 // pred_fallthru
          _
        // Predicated region
        $region37: #{_lambda_.1} parent=11 // pred_check
          %p331 = pneg %p207
        $region38: #{_lambda_.1} parent=11 // pred_check_branch
          %333 = sbr.rel (%p331) target = $region40
        $region39: #{_lambda_.1} parent=11 // pred_region
          _
        $region40: #{_lambda_.1} parent=11 // pred_fallthru
          _
        // Predicated region
        $region41: #{_lambda_.1} parent=11 // pred_check
          %p334 = pneg %p228
        $region42: #{_lambda_.1} parent=11 // pred_check_branch
          %336 = sbr.rel (%p334) target = $region44
        $region43: #{_lambda_.1} parent=11 // pred_region
          _
        $region44: #{_lambda_.1} parent=11 // pred_fallthru
          _
        // Predicated region
        $region45: #{_lambda_.1} parent=11 // pred_check
          %p337 = pneg %p249
        $region46: #{_lambda_.1} parent=11 // pred_check_branch
          %339 = sbr.rel (%p337) target = $region48
        $region47: #{_lambda_.1} parent=11 // pred_region
          _
        $region48: #{_lambda_.1} parent=11 // pred_fallthru
          _
        // Predicated region
        $region49: #{_lambda_.1} parent=11 // pred_check
          %p340 = pneg %p270
        $region50: #{_lambda_.1} parent=11 // pred_check_branch
          %342 = sbr.rel (%p340) target = $region52
        $region51: #{_lambda_.1} parent=11 // pred_region
          _
        $region52: #{_lambda_.1} parent=11 // pred_fallthru
          _
      $region12: #{_lambda_.1} parent=5 // pred_fallthru
        _
      %p343 = scmp.lt.s32.totalorder %s20, 4
      // Predicated region
      $region53: #{_lambda_.1} parent=5 // pred_check
        %p344 = pneg %p343
      $region54: #{_lambda_.1} parent=5 // pred_check_branch
        %346 = sbr.rel (%p344) target = $region56
      $region55: #{_lambda_.1} parent=5 // pred_region
        // Predicated region
        $region57: #{_lambda_.1} parent=55 // pred_check
          %p347 = pneg %p54
        $region58: #{_lambda_.1} parent=55 // pred_check_branch
          %349 = sbr.rel (%p347) target = $region60
        $region59: #{_lambda_.1} parent=55 // pred_region
          %p350 = scmp.lt.s32.totalorder %s27, 1
          %s351 = scalar_select %p350, %s27, 1
          %p352 = scmp.lt.s32.totalorder %s28, 1
          %s353 = scalar_select %p352, %s28, 1
          %s354 = smul.addr %s353, 11
          %s355 = smul.addr %s351, 22
          %s356 = sadd.s32 %s354, %s355
          %s357 = smul.addr %s356, 8
          %s358 = scalar_lea.vmem %s0, %s357
        $region60: #{_lambda_.1} parent=55 // pred_fallthru
          _
      $region56: #{_lambda_.1} parent=5 // pred_fallthru
        _
      %p359 = scmp.le.s32.totalorder 1, %s20
      %p360 = scmp.lt.s32.totalorder %s20, 5
      %p361 = pnand %p359, %p360
      %p362 = pneg %p361
      // Predicated region
      $region61: #{_lambda_.1} parent=5 // pred_check
        _
      $region62: #{_lambda_.1} parent=5 // pred_check_branch
        %364 = sbr.rel (%p361) target = $region64
      $region63: #{_lambda_.1} parent=5 // pred_region
        %s365 = ssub.s32 %s20, 1
        %p366 = scmp.lt.s32.totalorder %s29, 1
        %s367 = scalar_select %p366, %s29, 1
        %p368 = scmp.lt.s32.totalorder %s30, 1
        %s369 = scalar_select %p368, %s30, 1
        %s370 = smul.addr %s369, 11
        %s371 = smul.addr %s367, 22
        %s372 = sadd.s32 %s370, %s371
        %s373 = smul.addr %s372, 8
        %s374 = scalar_lea.vmem %s0, %s373
        %p375 = pneg %p60
        %p376 = pneg %p57
        %p377 = pneg %p81
        %p378 = pneg %p78
        %p379 = pneg %p102
        %p380 = pneg %p99
        %p381 = pneg %p123
        %p382 = pneg %p120
        %p383 = pneg %p144
        %p384 = pneg %p141
        %p385 = pneg %p165
        %p386 = pneg %p162
        %p387 = pneg %p186
        %p388 = pneg %p183
        %p389 = pneg %p207
        %p390 = pneg %p204
        %p391 = pneg %p228
        %p392 = pneg %p225
        %p393 = pneg %p249
        %p394 = pneg %p246
        %p395 = pneg %p270
        %p396 = pneg %p267
        %p397 = pneg %p298
        %p398 = pneg %p295
        %s399 = sand.u32 %s285, 1
        %s400 = scalar_lea.sflag [#allocation6], %s399
        %s401 = sand.u32 %s285, 1
        %s402 = smul.addr %s401, 8
        %s403 = scalar_lea.vmem [#allocation5], %s402
        %p404 = scmp.lt.s32.totalorder %s29, 1
        %s405 = scalar_select %p404, %s29, 1
        %p406 = scmp.lt.s32.totalorder %s30, 1
        %s407 = scalar_select %p406, %s30, 1
        %s408 = smul.addr %s407, 11
        %s409 = smul.addr %s405, 22
        %s410 = sadd.s32 %s408, %s409
        %s411 = smul.addr %s410, 8
        %s412 = scalar_lea.vmem %s0, %s411
        %v414 = vld [vmem:[%s412] ss:$2 sm:$0xff]
        %s415 = scalar_lea.vmem %s412, 16
        %v416 = vld [vmem:[%s415] ss:$2 sm:$0xff]
        %s417 = scalar_lea.vmem %s412, 32
        %v418 = vld [vmem:[%s417] ss:$2 sm:$0xff]
        %s419 = scalar_lea.vmem %s412, 48
        %v420 = vld [vmem:[%s419] ss:$2 sm:$0xff]
        %s421 = scalar_lea.vmem %s412, 64
        %v422 = vld [vmem:[%s421] ss:$2 sm:$0xff]
        %s423 = scalar_lea.vmem %s412, 80
        %v424 = vld [vmem:[%s423] ss:$2 sm:$0x1]
        %vm425 = vcmask 130048
        %426 = vst.msk [vmem:[#allocation4] sm:$0xff] %vm425, %v414
        %427 = vst.msk [vmem:[#allocation4 + $0x8] sm:$0xff] %vm425, %v416
        %428 = vst.msk [vmem:[#allocation4 + $0x10] sm:$0xff] %vm425, %v418
        %429 = vst.msk [vmem:[#allocation4 + $0x18] sm:$0xff] %vm425, %v420
        %430 = vst.msk [vmem:[#allocation4 + $0x20] sm:$0xff] %vm425, %v422
        %vm431 = vcmask 122880
        %432 = vst.msk [vmem:[#allocation4 + $0x28] sm:$0x1] %vm431, %v424
        %s433 = scalar_lea.vmem %s412, 1
        %v434 = vld [vmem:[%s433] ss:$2 sm:$0xff]
        %s435 = scalar_lea.vmem %s412, 17
        %v436 = vld [vmem:[%s435] ss:$2 sm:$0xff]
        %s437 = scalar_lea.vmem %s412, 33
        %v438 = vld [vmem:[%s437] ss:$2 sm:$0xff]
        %s439 = scalar_lea.vmem %s412, 49
        %v440 = vld [vmem:[%s439] ss:$2 sm:$0xff]
        %s441 = scalar_lea.vmem %s412, 65
        %v442 = vld [vmem:[%s441] ss:$2 sm:$0xff]
        %s443 = scalar_lea.vmem %s412, 81
        %v444 = vld [vmem:[%s443] ss:$2 sm:$0x1]
        %451 = vrot.lane.b32.xlu0 %v434, 16
        %v452 = vpop.permute.xlu0 %451
        %453 = vrot.lane.b32.xlu0 %v436, 16
        %v454 = vpop.permute.xlu0 %453
        %455 = vrot.lane.b32.xlu0 %v438, 16
        %v456 = vpop.permute.xlu0 %455
        %457 = vrot.lane.b32.xlu0 %v440, 16
        %v458 = vpop.permute.xlu0 %457
        %459 = vrot.lane.b32.xlu0 %v442, 16
        %v460 = vpop.permute.xlu0 %459
        %461 = vrot.lane.b32.xlu0 %v444, 16
        %v462 = vpop.permute.xlu0 %461
        %vm469 = vcmask 261248
        %470 = vst.msk [vmem:[#allocation4] sm:$0xff] %vm469, %v452
        %471 = vst.msk [vmem:[#allocation4 + $0x8] sm:$0xff] %vm469, %v454
        %472 = vst.msk [vmem:[#allocation4 + $0x10] sm:$0xff] %vm469, %v456
        %473 = vst.msk [vmem:[#allocation4 + $0x18] sm:$0xff] %vm469, %v458
        %474 = vst.msk [vmem:[#allocation4 + $0x20] sm:$0xff] %vm469, %v460
        %vm475 = vcmask 254080
        %476 = vst.msk [vmem:[#allocation4 + $0x28] sm:$0x1] %vm475, %v462
        %s477 = scalar_lea.vmem %s412, 2
        %v478 = vld [vmem:[%s477] ss:$2 sm:$0xff]
        %s479 = scalar_lea.vmem %s412, 18
        %v480 = vld [vmem:[%s479] ss:$2 sm:$0xff]
        %s481 = scalar_lea.vmem %s412, 34
        %v482 = vld [vmem:[%s481] ss:$2 sm:$0xff]
        %s483 = scalar_lea.vmem %s412, 50
        %v484 = vld [vmem:[%s483] ss:$2 sm:$0xff]
        %s485 = scalar_lea.vmem %s412, 66
        %v486 = vld [vmem:[%s485] ss:$2 sm:$0xff]
        %s487 = scalar_lea.vmem %s412, 82
        %v488 = vld [vmem:[%s487] ss:$2 sm:$0x1]
        %495 = vrot.lane.b32.xlu0 %v478, 32
        %v496 = vpop.permute.xlu0 %495
        %497 = vrot.lane.b32.xlu0 %v480, 32
        %v498 = vpop.permute.xlu0 %497
        %499 = vrot.lane.b32.xlu0 %v482, 32
        %v500 = vpop.permute.xlu0 %499
        %501 = vrot.lane.b32.xlu0 %v484, 32
        %v502 = vpop.permute.xlu0 %501
        %503 = vrot.lane.b32.xlu0 %v486, 32
        %v504 = vpop.permute.xlu0 %503
        %505 = vrot.lane.b32.xlu0 %v488, 32
        %v506 = vpop.permute.xlu0 %505
        %vm513 = vcmask 392448
        %514 = vst.msk [vmem:[#allocation4] sm:$0xff] %vm513, %v496
        %515 = vst.msk [vmem:[#allocation4 + $0x8] sm:$0xff] %vm513, %v498
        %516 = vst.msk [vmem:[#allocation4 + $0x10] sm:$0xff] %vm513, %v500
        %517 = vst.msk [vmem:[#allocation4 + $0x18] sm:$0xff] %vm513, %v502
        %518 = vst.msk [vmem:[#allocation4 + $0x20] sm:$0xff] %vm513, %v504
        %vm519 = vcmask 385280
        %520 = vst.msk [vmem:[#allocation4 + $0x28] sm:$0x1] %vm519, %v506
        %s521 = scalar_lea.vmem %s412, 3
        %v522 = vld [vmem:[%s521] ss:$2 sm:$0xff]
        %s523 = scalar_lea.vmem %s412, 19
        %v524 = vld [vmem:[%s523] ss:$2 sm:$0xff]
        %s525 = scalar_lea.vmem %s412, 35
        %v526 = vld [vmem:[%s525] ss:$2 sm:$0xff]
        %s527 = scalar_lea.vmem %s412, 51
        %v528 = vld [vmem:[%s527] ss:$2 sm:$0xff]
        %s529 = scalar_lea.vmem %s412, 67
        %v530 = vld [vmem:[%s529] ss:$2 sm:$0xff]
        %s531 = scalar_lea.vmem %s412, 83
        %v532 = vld [vmem:[%s531] ss:$2 sm:$0x1]
        %539 = vrot.lane.b32.xlu0 %v522, 48
        %v540 = vpop.permute.xlu0 %539
        %541 = vrot.lane.b32.xlu0 %v524, 48
        %v542 = vpop.permute.xlu0 %541
        %543 = vrot.lane.b32.xlu0 %v526, 48
        %v544 = vpop.permute.xlu0 %543
        %545 = vrot.lane.b32.xlu0 %v528, 48
        %v546 = vpop.permute.xlu0 %545
        %547 = vrot.lane.b32.xlu0 %v530, 48
        %v548 = vpop.permute.xlu0 %547
        %549 = vrot.lane.b32.xlu0 %v532, 48
        %v550 = vpop.permute.xlu0 %549
        %vm557 = vcmask 523648
        %558 = vst.msk [vmem:[#allocation4] sm:$0xff] %vm557, %v540
        %559 = vst.msk [vmem:[#allocation4 + $0x8] sm:$0xff] %vm557, %v542
        %560 = vst.msk [vmem:[#allocation4 + $0x10] sm:$0xff] %vm557, %v544
        %561 = vst.msk [vmem:[#allocation4 + $0x18] sm:$0xff] %vm557, %v546
        %562 = vst.msk [vmem:[#allocation4 + $0x20] sm:$0xff] %vm557, %v548
        %vm563 = vcmask 516480
        %564 = vst.msk [vmem:[#allocation4 + $0x28] sm:$0x1] %vm563, %v550
        %s565 = scalar_lea.vmem %s412, 4
        %v566 = vld [vmem:[%s565] ss:$2 sm:$0xff]
        %s567 = scalar_lea.vmem %s412, 20
        %v568 = vld [vmem:[%s567] ss:$2 sm:$0xff]
        %s569 = scalar_lea.vmem %s412, 36
        %v570 = vld [vmem:[%s569] ss:$2 sm:$0xff]
        %s571 = scalar_lea.vmem %s412, 52
        %v572 = vld [vmem:[%s571] ss:$2 sm:$0xff]
        %s573 = scalar_lea.vmem %s412, 68
        %v574 = vld [vmem:[%s573] ss:$2 sm:$0xff]
        %s575 = scalar_lea.vmem %s412, 84
        %v576 = vld [vmem:[%s575] ss:$2 sm:$0x1]
        %583 = vrot.lane.b32.xlu0 %v566, 64
        %v584 = vpop.permute.xlu0 %583
        %585 = vrot.lane.b32.xlu0 %v568, 64
        %v586 = vpop.permute.xlu0 %585
        %587 = vrot.lane.b32.xlu0 %v570, 64
        %v588 = vpop.permute.xlu0 %587
        %589 = vrot.lane.b32.xlu0 %v572, 64
        %v590 = vpop.permute.xlu0 %589
        %591 = vrot.lane.b32.xlu0 %v574, 64
        %v592 = vpop.permute.xlu0 %591
        %593 = vrot.lane.b32.xlu0 %v576, 64
        %v594 = vpop.permute.xlu0 %593
        %vm601 = vcmask 654848
        %602 = vst.msk [vmem:[#allocation4] sm:$0xff] %vm601, %v584
        %603 = vst.msk [vmem:[#allocation4 + $0x8] sm:$0xff] %vm601, %v586
        %604 = vst.msk [vmem:[#allocation4 + $0x10] sm:$0xff] %vm601, %v588
        %605 = vst.msk [vmem:[#allocation4 + $0x18] sm:$0xff] %vm601, %v590
        %606 = vst.msk [vmem:[#allocation4 + $0x20] sm:$0xff] %vm601, %v592
        %vm607 = vcmask 647680
        %608 = vst.msk [vmem:[#allocation4 + $0x28] sm:$0x1] %vm607, %v594
        %v609 = vld [vmem:[#allocation4] sm:$0xff]
        %v610 = vld [vmem:[#allocation4 + $0x8] sm:$0xff]
        %v611 = vld [vmem:[#allocation4 + $0x10] sm:$0xff]
        %v612 = vld [vmem:[#allocation4 + $0x18] sm:$0xff]
        %v613 = vld [vmem:[#allocation4 + $0x20] sm:$0xff]
        %v614 = vld [vmem:[#allocation4 + $0x28] sm:$0x1]
        %v615 = vpack.c.bf16 %v610, %v609
        %v616 = vpack.c.bf16 %v612, %v611
        %v617 = vpack.c.bf16 %v614, %v613
        %v618 = vld [vmem:[%s1] sm:$0xf]
        %v619 = vld [vmem:[%s1 + $0x4] sm:$0xf]
        %v620 = vld [vmem:[%s1 + $0x8] sm:$0xf]
        %v621 = vld [vmem:[%s1 + $0xc] sm:$0xf]
        %v622 = vld [vmem:[%s1 + $0x10] sm:$0xf]
        %v623 = vld [vmem:[%s1 + $0x14] sm:$0xf]
        %v624 = vld [vmem:[%s1 + $0x18] sm:$0xf]
        %v625 = vld [vmem:[%s1 + $0x1c] sm:$0xf]
        %v626 = vld [vmem:[%s1 + $0x20] sm:$0xf]
        %v627 = vld [vmem:[%s1 + $0x24] sm:$0xf]
        %v628 = vld [vmem:[%s4] sm:$0x1]
        %v630 = vlaneseq
        %v631 = vshrl.u32 %v630, 7
        %v632 = vsub.s32 0, %v631
        %v633 = vrot.slane %v628, %v632
        %v645 = vunpack.c.l.b16 %v618
        %v646 = vunpack.c.l.b16 %v619
        %v647 = vunpack.c.l.b16 %v620
        %v648 = vunpack.c.l.b16 %v621
        %v649 = vunpack.c.l.b16 %v622
        %v650 = vunpack.c.l.b16 %v623
        %v651 = vunpack.c.l.b16 %v624
        %v652 = vunpack.c.l.b16 %v625
        %v653 = vunpack.c.l.b16 %v626
        %v654 = vunpack.c.l.b16 %v627
        %v655 = vpack.c.b16 %v646, %v645
        %v656 = vpack.c.b16 %v648, %v647
        %v657 = vpack.c.b16 %v650, %v649
        %v658 = vpack.c.b16 %v652, %v651
        %v659 = vpack.c.b16 %v654, %v653
        %vm665 = vcmask 654336
        %v667 = vsel %vm665, %v615, 0
        %v670 = vsel %vm665, %v616, 0
        %v673 = vsel %vm665, %v617, 0
        %675 = vmatprep.subr.bf16.mxu0 0
        %676 = vmatpush1.bf16.msra.mxu0 %v655
        %677 = vmatprep.subr.bf16.mxu0 0
        %678 = vmatpush1.bf16.msra.mxu0 %v656
        %679 = vmatprep.subr.bf16.mxu0 0
        %680 = vmatpush1.bf16.msra.mxu0 %v657
        %681 = vmatprep.subr.bf16.mxu0 0
        %682 = vmatpush1.bf16.msra.mxu0 %v658
        %683 = vmatprep.subr.bf16.mxu0 0
        %684 = vmatpush1.bf16.msra.mxu0 %v659
        %685 = vmatprep.subr.bf16.mxu0 0
        %686 = vmatpush1.bf16.msra.mxu0 0
        %687 = vmatprep.subr.bf16.mxu0 0
        %688 = vmatpush1.bf16.msra.mxu0 0
        %689 = vmatprep.subr.bf16.mxu0 0
        %690 = vmatpush1.bf16.msra.mxu0 0
        %691 = vmatprep.subr.bf16.mxu0 0
        %692 = vmatpush1.bf16.msra.mxu0 0
        %693 = vmatprep.subr.bf16.mxu0 0
        %694 = vmatpush1.bf16.msra.mxu0 0
        %695 = vmatprep.subr.bf16.mxu0 0
        %696 = vmatpush1.bf16.msra.mxu0 0
        %697 = vmatprep.subr.bf16.mxu0 0
        %698 = vmatpush1.bf16.msra.mxu0 0
        %699 = vmatprep.subr.bf16.mxu0 0
        %700 = vmatpush1.bf16.msra.mxu0 0
        %701 = vmatprep.subr.bf16.mxu0 0
        %702 = vmatpush1.bf16.msra.mxu0 0
        %703 = vmatprep.subr.bf16.mxu0 0
        %704 = vmatpush1.bf16.msra.mxu0 0
        %705 = vmatprep.subr.bf16.mxu0 0
        %706 = vmatpush1.bf16.msra.mxu0 0
        %707 = vmatprep.mubr.bf16.mxu0 0
        %708 = vmatmul.mubr.bf16.gmra.mrb[0].mxu0 %v667
        %v709 = vpop.f32.mrb[0].mxu0
        %v710 = vadd.f32 %v633, %v709
        %v711 = vpop.f32.mrb[0].mxu0
        %v712 = vpop.f32.mrb[0].mxu0
        %v713 = vadd.f32 %v633, %v712
        %v714 = vpop.f32.mrb[0].mxu0
        %715 = vmatprep.mubr.bf16.mxu0 0
        %716 = vmatmul.mubr.bf16.gmra.mrb[0].mxu0 %v670
        %v717 = vpop.f32.mrb[0].mxu0
        %v718 = vadd.f32 %v633, %v717
        %v719 = vpop.f32.mrb[0].mxu0
        %v720 = vpop.f32.mrb[0].mxu0
        %v721 = vadd.f32 %v633, %v720
        %v722 = vpop.f32.mrb[0].mxu0
        %723 = vmatprep.mubr.bf16.mxu0 0
        %724 = vmatmul.mubr.bf16.gmra.mrb[0].mxu0 %v673
        %v725 = vpop.f32.mrb[0].mxu0
        %v726 = vadd.f32 %v633, %v725
        %v727 = vpop.f32.mrb[0].mxu0
        %v728 = vpop.f32.mrb[0].mxu0
        %v729 = vadd.f32 %v633, %v728
        %v730 = vpop.f32.mrb[0].mxu0
        %731 = vdwg.mxu0
        %v732 = vxor.u32 %v710, 2147483648
        %v733 = vxor.u32 %v713, 2147483648
        %v734 = vxor.u32 %v718, 2147483648
        %v735 = vxor.u32 %v721, 2147483648
        %v736 = vxor.u32 %v726, 2147483648
        %v737 = vxor.u32 %v729, 2147483648
        %v738 = vmul.f32 %v732, 1.442695
        %v739 = vpow.pop %v738
        %v740 = vmul.f32 %v733, 1.442695
        %v741 = vpow.pop %v740
        %v742 = vmul.f32 %v734, 1.442695
        %v743 = vpow.pop %v742
        %v744 = vmul.f32 %v735, 1.442695
        %v745 = vpow.pop %v744
        %v746 = vmul.f32 %v736, 1.442695
        %v747 = vpow.pop %v746
        %v748 = vmul.f32 %v737, 1.442695
        %v749 = vpow.pop %v748
        %v750 = vadd.f32 %v739, 1.0
        %v751 = vadd.f32 %v741, 1.0
        %v752 = vadd.f32 %v743, 1.0
        %v753 = vadd.f32 %v745, 1.0
        %v754 = vadd.f32 %v747, 1.0
        %v755 = vadd.f32 %v749, 1.0
        %v756 = vrcp.pop %v750
        %v757 = vmul.f32 1.0, %v756
        %v758 = vrcp.pop %v751
        %v759 = vmul.f32 1.0, %v758
        %v760 = vrcp.pop %v752
        %v761 = vmul.f32 1.0, %v760
        %v762 = vrcp.pop %v753
        %v763 = vmul.f32 1.0, %v762
        %v764 = vrcp.pop %v754
        %v765 = vmul.f32 1.0, %v764
        %v766 = vrcp.pop %v755
        %v767 = vmul.f32 1.0, %v766
        %774 = vrot.lane.b32.xlu0 %v757, 112
        %v775 = vpop.permute.xlu0 %774
        %776 = vrot.lane.b32.xlu0 %v759, 112
        %v777 = vpop.permute.xlu0 %776
        %778 = vrot.lane.b32.xlu0 %v761, 112
        %v779 = vpop.permute.xlu0 %778
        %780 = vrot.lane.b32.xlu0 %v763, 112
        %v781 = vpop.permute.xlu0 %780
        %782 = vrot.lane.b32.xlu0 %v765, 112
        %v783 = vpop.permute.xlu0 %782
        %784 = vrot.lane.b32.xlu0 %v767, 112
        %v785 = vpop.permute.xlu0 %784
        %v792 = vmul.f32 %v710, %v775
        %v793 = vmul.f32 %v713, %v777
        %v794 = vmul.f32 %v718, %v779
        %v795 = vmul.f32 %v721, %v781
        %v796 = vmul.f32 %v726, %v783
        %v797 = vmul.f32 %v729, %v785
        %s798 = smul.u32 %s30, 32
        %s799 = sadd.s32 %s798, 4294967290
        %v800 = vlaneseq
        %v801 = vshrl.u32 %v800, 7
        %v802 = vadd.s32 %v801, 8
        %v803 = vadd.s32 %v801, 16
        %v804 = vadd.s32 %v801, 24
        %v805 = vadd.s32 %v801, 32
        %v806 = vadd.s32 %v801, 40
        %v807 = vstv %s799
        %v808 = vadd.s32 %v801, %v807
        %v809 = vadd.s32 %v802, %v807
        %v810 = vadd.s32 %v803, %v807
        %v811 = vadd.s32 %v804, %v807
        %v812 = vadd.s32 %v805, %v807
        %v813 = vadd.s32 %v806, %v807
        %vm814 = vcmp.ge.s32.totalorder %v808, 0
        %vm815 = vcmp.ge.s32.totalorder %v809, 0
        %vm816 = vcmp.ge.s32.totalorder %v810, 0
        %vm817 = vcmp.ge.s32.totalorder %v811, 0
        %vm818 = vcmp.ge.s32.totalorder %v812, 0
        %vm819 = vcmp.ge.s32.totalorder %v813, 0
        %vm820 = vcmp.lt.s32.totalorder %v808, 64
        %vm821 = vcmp.lt.s32.totalorder %v809, 64
        %vm822 = vcmp.lt.s32.totalorder %v810, 64
        %vm823 = vcmp.lt.s32.totalorder %v811, 64
        %vm824 = vcmp.lt.s32.totalorder %v812, 64
        %vm825 = vcmp.lt.s32.totalorder %v813, 64
        %vm826 = vmand %vm814, %vm820
        %vm827 = vmand %vm815, %vm821
        %vm828 = vmand %vm816, %vm822
        %vm829 = vmand %vm817, %vm823
        %vm830 = vmand %vm818, %vm824
        %vm831 = vmand %vm819, %vm825
        %v832 = vsel %vm826, 1, 0
        %v833 = vsel %vm827, 1, 0
        %v834 = vsel %vm828, 1, 0
        %v835 = vsel %vm829, 1, 0
        %v836 = vsel %vm830, 1, 0
        %v837 = vsel %vm831, 1, 0
        %vm838 = vcmp.eq.s32.totalorder %v832, 1
        %vm839 = vcmp.eq.s32.totalorder %v833, 1
        %vm840 = vcmp.eq.s32.totalorder %v834, 1
        %vm841 = vcmp.eq.s32.totalorder %v835, 1
        %vm842 = vcmp.eq.s32.totalorder %v836, 1
        %vm843 = vcmp.eq.s32.totalorder %v837, 1
        %v844 = vsel %vm838, %v792, 0.0
        %v845 = vsel %vm839, %v793, 0.0
        %v846 = vsel %vm840, %v794, 0.0
        %v847 = vsel %vm841, %v795, 0.0
        %v848 = vsel %vm842, %v796, 0.0
        %v849 = vsel %vm843, %v797, 0.0
        %850 = vst.msk [vmem:[#allocation2] sm:$0xff] %vm425, %v844
        %851 = vst.msk [vmem:[#allocation2 + $0x8] sm:$0xff] %vm425, %v845
        %852 = vst.msk [vmem:[#allocation2 + $0x10] sm:$0xff] %vm425, %v846
        %853 = vst.msk [vmem:[#allocation2 + $0x18] sm:$0xff] %vm425, %v847
        %854 = vst.msk [vmem:[#allocation2 + $0x20] sm:$0xff] %vm425, %v848
        %855 = vst.msk [vmem:[#allocation2 + $0x28] sm:$0x1] %vm431, %v849
        %v856 = vld [vmem:[#allocation2] ss:$2 sm:$0xff]
        %s857 = scalar_lea.vmem [#allocation2], 16
        %v858 = vld [vmem:[%s857] ss:$2 sm:$0xff]
        %s859 = scalar_lea.vmem [#allocation2], 32
        %v860 = vld [vmem:[%s859] ss:$2 sm:$0x7]
        %861 = vst.msk [vmem:[#allocation4] sm:$0xff] %vm425, %v856
        %862 = vst.msk [vmem:[#allocation4 + $0x8] sm:$0xff] %vm425, %v858
        %vm863 = vcmask 124928
        %864 = vst.msk [vmem:[#allocation4 + $0x10] sm:$0x7] %vm863, %v860
        %s865 = scalar_lea.vmem [#allocation2], 1
        %v866 = vld [vmem:[%s865] ss:$2 sm:$0xff]
        %s867 = scalar_lea.vmem [#allocation2], 17
        %v868 = vld [vmem:[%s867] ss:$2 sm:$0xff]
        %s869 = scalar_lea.vmem [#allocation2], 33
        %v870 = vld [vmem:[%s869] ss:$2 sm:$0x7]
        %874 = vrot.lane.b32.xlu0 %v866, 16
        %v875 = vpop.permute.xlu0 %874
        %876 = vrot.lane.b32.xlu0 %v868, 16
        %v877 = vpop.permute.xlu0 %876
        %878 = vrot.lane.b32.xlu0 %v870, 16
        %v879 = vpop.permute.xlu0 %878
        %883 = vst.msk [vmem:[#allocation4] sm:$0xff] %vm469, %v875
        %884 = vst.msk [vmem:[#allocation4 + $0x8] sm:$0xff] %vm469, %v877
        %vm885 = vcmask 256128
        %886 = vst.msk [vmem:[#allocation4 + $0x10] sm:$0x7] %vm885, %v879
        %s887 = scalar_lea.vmem [#allocation2], 2
        %v888 = vld [vmem:[%s887] ss:$2 sm:$0xff]
        %s889 = scalar_lea.vmem [#allocation2], 18
        %v890 = vld [vmem:[%s889] ss:$2 sm:$0xff]
        %s891 = scalar_lea.vmem [#allocation2], 34
        %v892 = vld [vmem:[%s891] ss:$2 sm:$0x7]
        %896 = vrot.lane.b32.xlu0 %v888, 32
        %v897 = vpop.permute.xlu0 %896
        %898 = vrot.lane.b32.xlu0 %v890, 32
        %v899 = vpop.permute.xlu0 %898
        %900 = vrot.lane.b32.xlu0 %v892, 32
        %v901 = vpop.permute.xlu0 %900
        %905 = vst.msk [vmem:[#allocation4] sm:$0xff] %vm513, %v897
        %906 = vst.msk [vmem:[#allocation4 + $0x8] sm:$0xff] %vm513, %v899
        %vm907 = vcmask 387328
        %908 = vst.msk [vmem:[#allocation4 + $0x10] sm:$0x7] %vm907, %v901
        %s909 = scalar_lea.vmem [#allocation2], 3
        %v910 = vld [vmem:[%s909] ss:$2 sm:$0xff]
        %s911 = scalar_lea.vmem [#allocation2], 19
        %v912 = vld [vmem:[%s911] ss:$2 sm:$0xff]
        %s913 = scalar_lea.vmem [#allocation2], 35
        %v914 = vld [vmem:[%s913] ss:$2 sm:$0x7]
        %918 = vrot.lane.b32.xlu0 %v910, 48
        %v919 = vpop.permute.xlu0 %918
        %920 = vrot.lane.b32.xlu0 %v912, 48
        %v921 = vpop.permute.xlu0 %920
        %922 = vrot.lane.b32.xlu0 %v914, 48
        %v923 = vpop.permute.xlu0 %922
        %927 = vst.msk [vmem:[#allocation4] sm:$0xff] %vm557, %v919
        %928 = vst.msk [vmem:[#allocation4 + $0x8] sm:$0xff] %vm557, %v921
        %vm929 = vcmask 518528
        %930 = vst.msk [vmem:[#allocation4 + $0x10] sm:$0x7] %vm929, %v923
        %s931 = scalar_lea.vmem [#allocation2], 4
        %v932 = vld [vmem:[%s931] ss:$2 sm:$0xff]
        %s933 = scalar_lea.vmem [#allocation2], 20
        %v934 = vld [vmem:[%s933] ss:$2 sm:$0xff]
        %s935 = scalar_lea.vmem [#allocation2], 36
        %v936 = vld [vmem:[%s935] ss:$2 sm:$0x7]
        %940 = vrot.lane.b32.xlu0 %v932, 64
        %v941 = vpop.permute.xlu0 %940
        %942 = vrot.lane.b32.xlu0 %v934, 64
        %v943 = vpop.permute.xlu0 %942
        %944 = vrot.lane.b32.xlu0 %v936, 64
        %v945 = vpop.permute.xlu0 %944
        %949 = vst.msk [vmem:[#allocation4] sm:$0xff] %vm601, %v941
        %950 = vst.msk [vmem:[#allocation4 + $0x8] sm:$0xff] %vm601, %v943
        %vm951 = vcmask 649728
        %952 = vst.msk [vmem:[#allocation4 + $0x10] sm:$0x7] %vm951, %v945
        %v953 = vld [vmem:[#allocation4] sm:$0xff]
        %v954 = vld [vmem:[#allocation4 + $0x8] sm:$0xff]
        %v955 = vld [vmem:[#allocation4 + $0x10] sm:$0x7]
        %v956 = vpack.c.bf16 %v954, %v953
        %v957 = vpack.c.bf16 %v955, %v955
        %v958 = vld [vmem:[%s2] sm:$0xf]
        %v959 = vld [vmem:[%s2 + $0x4] sm:$0xf]
        %v960 = vld [vmem:[%s2 + $0x8] sm:$0xf]
        %v961 = vld [vmem:[%s2 + $0xc] sm:$0xf]
        %v962 = vld [vmem:[%s2 + $0x10] sm:$0xf]
        %v963 = vld [vmem:[%s2 + $0x14] sm:$0xf]
        %v964 = vld [vmem:[%s2 + $0x18] sm:$0xf]
        %v965 = vld [vmem:[%s2 + $0x1c] sm:$0xf]
        %v966 = vld [vmem:[%s2 + $0x20] sm:$0xf]
        %v967 = vld [vmem:[%s2 + $0x24] sm:$0xf]
        %v968 = vld [vmem:[%s5] sm:$0x1]
        %v970 = vlaneseq
        %v971 = vshrl.u32 %v970, 7
        %v972 = vsub.s32 0, %v971
        %v973 = vrot.slane %v968, %v972
        %v985 = vunpack.c.l.b16 %v958
        %v986 = vunpack.c.l.b16 %v959
        %v987 = vunpack.c.l.b16 %v960
        %v988 = vunpack.c.l.b16 %v961
        %v989 = vunpack.c.l.b16 %v962
        %v990 = vunpack.c.l.b16 %v963
        %v991 = vunpack.c.l.b16 %v964
        %v992 = vunpack.c.l.b16 %v965
        %v993 = vunpack.c.l.b16 %v966
        %v994 = vunpack.c.l.b16 %v967
        %v995 = vpack.c.b16 %v986, %v985
        %v996 = vpack.c.b16 %v988, %v987
        %v997 = vpack.c.b16 %v990, %v989
        %v998 = vpack.c.b16 %v992, %v991
        %v999 = vpack.c.b16 %v994, %v993
        %v1006 = vsel %vm665, %v956, 0
        %v1009 = vsel %vm665, %v957, 0
        %1011 = vmatprep.subr.bf16.mxu0 0
        %1012 = vmatpush1.bf16.msra.mxu0 %v995
        %1013 = vmatprep.subr.bf16.mxu0 0
        %1014 = vmatpush1.bf16.msra.mxu0 %v996
        %1015 = vmatprep.subr.bf16.mxu0 0
        %1016 = vmatpush1.bf16.msra.mxu0 %v997
        %1017 = vmatprep.subr.bf16.mxu0 0
        %1018 = vmatpush1.bf16.msra.mxu0 %v998
        %1019 = vmatprep.subr.bf16.mxu0 0
        %1020 = vmatpush1.bf16.msra.mxu0 %v999
        %1021 = vmatprep.subr.bf16.mxu0 0
        %1022 = vmatpush1.bf16.msra.mxu0 0
        %1023 = vmatprep.subr.bf16.mxu0 0
        %1024 = vmatpush1.bf16.msra.mxu0 0
        %1025 = vmatprep.subr.bf16.mxu0 0
        %1026 = vmatpush1.bf16.msra.mxu0 0
        %1027 = vmatprep.subr.bf16.mxu0 0
        %1028 = vmatpush1.bf16.msra.mxu0 0
        %1029 = vmatprep.subr.bf16.mxu0 0
        %1030 = vmatpush1.bf16.msra.mxu0 0
        %1031 = vmatprep.subr.bf16.mxu0 0
        %1032 = vmatpush1.bf16.msra.mxu0 0
        %1033 = vmatprep.subr.bf16.mxu0 0
        %1034 = vmatpush1.bf16.msra.mxu0 0
        %1035 = vmatprep.subr.bf16.mxu0 0
        %1036 = vmatpush1.bf16.msra.mxu0 0
        %1037 = vmatprep.subr.bf16.mxu0 0
        %1038 = vmatpush1.bf16.msra.mxu0 0
        %1039 = vmatprep.subr.bf16.mxu0 0
        %1040 = vmatpush1.bf16.msra.mxu0 0
        %1041 = vmatprep.subr.bf16.mxu0 0
        %1042 = vmatpush1.bf16.msra.mxu0 0
        %1043 = vmatprep.mubr.bf16.mxu0 0
        %1044 = vmatmul.mubr.bf16.gmra.mrb[0].mxu0 %v1006
        %v1045 = vpop.f32.mrb[0].mxu0
        %v1046 = vadd.f32 %v973, %v1045
        %v1047 = vpop.f32.mrb[0].mxu0
        %v1048 = vpop.f32.mrb[0].mxu0
        %v1049 = vadd.f32 %v973, %v1048
        %v1050 = vpop.f32.mrb[0].mxu0
        %1051 = vmatprep.mubr.bf16.mxu0 0
        %1052 = vmatmul.mubr.bf16.gmra.mrb[0].mxu0 %v1009
        %v1053 = vpop.f32.mrb[0].mxu0
        %v1054 = vadd.f32 %v973, %v1053
        %v1055 = vpop.f32.mrb[0].mxu0
        %v1056 = vpop.f32.mrb[0].mxu0
        %v1057 = vpop.f32.mrb[0].mxu0
        %1058 = vdwg.mxu0
        %v1059 = vxor.u32 %v1046, 2147483648
        %v1060 = vxor.u32 %v1049, 2147483648
        %v1061 = vxor.u32 %v1054, 2147483648
        %v1062 = vmul.f32 %v1059, 1.442695
        %v1063 = vpow.pop %v1062
        %v1064 = vmul.f32 %v1060, 1.442695
        %v1065 = vpow.pop %v1064
        %v1066 = vmul.f32 %v1061, 1.442695
        %v1067 = vpow.pop %v1066
        %v1068 = vadd.f32 %v1063, 1.0
        %v1069 = vadd.f32 %v1065, 1.0
        %v1070 = vadd.f32 %v1067, 1.0
        %v1071 = vrcp.pop %v1068
        %v1072 = vmul.f32 1.0, %v1071
        %v1073 = vrcp.pop %v1069
        %v1074 = vmul.f32 1.0, %v1073
        %v1075 = vrcp.pop %v1070
        %v1076 = vmul.f32 1.0, %v1075
        %1080 = vrot.lane.b32.xlu0 %v1072, 112
        %v1081 = vpop.permute.xlu0 %1080
        %1082 = vrot.lane.b32.xlu0 %v1074, 112
        %v1083 = vpop.permute.xlu0 %1082
        %1084 = vrot.lane.b32.xlu0 %v1076, 112
        %v1085 = vpop.permute.xlu0 %1084
        %v1089 = vmul.f32 %v1046, %v1081
        %v1090 = vmul.f32 %v1049, %v1083
        %v1091 = vmul.f32 %v1054, %v1085
        %s1092 = smul.u32 %s30, 16
        %s1093 = sadd.s32 %s1092, 4294967294
        %v1094 = vstv %s1093
        %v1095 = vadd.s32 %v801, %v1094
        %v1096 = vadd.s32 %v802, %v1094
        %v1097 = vadd.s32 %v803, %v1094
        %vm1098 = vcmp.ge.s32.totalorder %v1095, 0
        %vm1099 = vcmp.ge.s32.totalorder %v1096, 0
        %vm1100 = vcmp.ge.s32.totalorder %v1097, 0
        %vm1101 = vcmp.lt.s32.totalorder %v1095, 32
        %vm1102 = vcmp.lt.s32.totalorder %v1096, 32
        %vm1103 = vcmp.lt.s32.totalorder %v1097, 32
        %vm1104 = vmand %vm1098, %vm1101
        %vm1105 = vmand %vm1099, %vm1102
        %vm1106 = vmand %vm1100, %vm1103
        %v1107 = vsel %vm1104, 1, 0
        %v1108 = vsel %vm1105, 1, 0
        %v1109 = vsel %vm1106, 1, 0
        %vm1110 = vcmp.eq.s32.totalorder %v1107, 1
        %vm1111 = vcmp.eq.s32.totalorder %v1108, 1
        %vm1112 = vcmp.eq.s32.totalorder %v1109, 1
        %v1113 = vsel %vm1110, %v1089, 0.0
        %v1114 = vsel %vm1111, %v1090, 0.0
        %v1115 = vsel %vm1112, %v1091, 0.0
        %1116 = vst.msk [vmem:[#allocation3] sm:$0xff] %vm425, %v1113
        %1117 = vst.msk [vmem:[#allocation3 + $0x8] sm:$0xff] %vm425, %v1114
        %1118 = vst.msk [vmem:[#allocation3 + $0x10] sm:$0x7] %vm863, %v1115
        %v1119 = vld [vmem:[#allocation3] ss:$2 sm:$0xff]
        %1120 = vst.msk [vmem:[#allocation4] sm:$0xff] %vm425, %v1119
        %s1121 = scalar_lea.vmem [#allocation3], 1
        %v1122 = vld [vmem:[%s1121] ss:$2 sm:$0xff]
        %1124 = vrot.lane.b32.xlu0 %v1122, 16
        %v1125 = vpop.permute.xlu0 %1124
        %1127 = vst.msk [vmem:[#allocation4] sm:$0xff] %vm469, %v1125
        %s1128 = scalar_lea.vmem [#allocation3], 2
        %v1129 = vld [vmem:[%s1128] ss:$2 sm:$0xff]
        %1131 = vrot.lane.b32.xlu0 %v1129, 32
        %v1132 = vpop.permute.xlu0 %1131
        %1134 = vst.msk [vmem:[#allocation4] sm:$0xff] %vm513, %v1132
        %s1135 = scalar_lea.vmem [#allocation3], 3
        %v1136 = vld [vmem:[%s1135] ss:$2 sm:$0xff]
        %1138 = vrot.lane.b32.xlu0 %v1136, 48
        %v1139 = vpop.permute.xlu0 %1138
        %1141 = vst.msk [vmem:[#allocation4] sm:$0xff] %vm557, %v1139
        %s1142 = scalar_lea.vmem [#allocation3], 4
        %v1143 = vld [vmem:[%s1142] ss:$2 sm:$0xff]
        %1145 = vrot.lane.b32.xlu0 %v1143, 64
        %v1146 = vpop.permute.xlu0 %1145
        %1148 = vst.msk [vmem:[#allocation4] sm:$0xff] %vm601, %v1146
        %v1149 = vld [vmem:[#allocation4] sm:$0xff]
        %v1150 = vpack.c.bf16 %v1149, %v1149
        %v1151 = vld [vmem:[%s3] sm:$0xf]
        %v1152 = vld [vmem:[%s3 + $0x4] sm:$0xf]
        %v1153 = vld [vmem:[%s3 + $0x8] sm:$0xf]
        %v1154 = vld [vmem:[%s3 + $0xc] sm:$0xf]
        %v1155 = vld [vmem:[%s3 + $0x10] sm:$0xf]
        %v1156 = vld [vmem:[%s3 + $0x14] sm:$0xf]
        %v1157 = vld [vmem:[%s3 + $0x18] sm:$0xf]
        %v1158 = vld [vmem:[%s3 + $0x1c] sm:$0xf]
        %v1159 = vld [vmem:[%s3 + $0x20] sm:$0xf]
        %v1160 = vld [vmem:[%s3 + $0x24] sm:$0xf]
        %v1161 = vld [vmem:[%s6] sm:$0x1]
        %v1163 = vlaneseq
        %v1164 = vshrl.u32 %v1163, 7
        %v1165 = vsub.s32 0, %v1164
        %v1166 = vrot.slane %v1161, %v1165
        %v1178 = vunpack.c.l.b16 %v1151
        %v1179 = vunpack.c.l.b16 %v1152
        %v1180 = vunpack.c.l.b16 %v1153
        %v1181 = vunpack.c.l.b16 %v1154
        %v1182 = vunpack.c.l.b16 %v1155
        %v1183 = vunpack.c.l.b16 %v1156
        %v1184 = vunpack.c.l.b16 %v1157
        %v1185 = vunpack.c.l.b16 %v1158
        %v1186 = vunpack.c.l.b16 %v1159
        %v1187 = vunpack.c.l.b16 %v1160
        %v1188 = vpack.c.b16 %v1179, %v1178
        %v1189 = vpack.c.b16 %v1181, %v1180
        %v1190 = vpack.c.b16 %v1183, %v1182
        %v1191 = vpack.c.b16 %v1185, %v1184
        %v1192 = vpack.c.b16 %v1187, %v1186
        %v1199 = vsel %vm665, %v1150, 0
        %1201 = vmatprep.subr.bf16.mxu0 0
        %1202 = vmatpush1.bf16.msra.mxu0 %v1188
        %1203 = vmatprep.subr.bf16.mxu0 0
        %1204 = vmatpush1.bf16.msra.mxu0 %v1189
        %1205 = vmatprep.subr.bf16.mxu0 0
        %1206 = vmatpush1.bf16.msra.mxu0 %v1190
        %1207 = vmatprep.subr.bf16.mxu0 0
        %1208 = vmatpush1.bf16.msra.mxu0 %v1191
        %1209 = vmatprep.subr.bf16.mxu0 0
        %1210 = vmatpush1.bf16.msra.mxu0 %v1192
        %1211 = vmatprep.subr.bf16.mxu0 0
        %1212 = vmatpush1.bf16.msra.mxu0 0
        %1213 = vmatprep.subr.bf16.mxu0 0
        %1214 = vmatpush1.bf16.msra.mxu0 0
        %1215 = vmatprep.subr.bf16.mxu0 0
        %1216 = vmatpush1.bf16.msra.mxu0 0
        %1217 = vmatprep.subr.bf16.mxu0 0
        %1218 = vmatpush1.bf16.msra.mxu0 0
        %1219 = vmatprep.subr.bf16.mxu0 0
        %1220 = vmatpush1.bf16.msra.mxu0 0
        %1221 = vmatprep.subr.bf16.mxu0 0
        %1222 = vmatpush1.bf16.msra.mxu0 0
        %1223 = vmatprep.subr.bf16.mxu0 0
        %1224 = vmatpush1.bf16.msra.mxu0 0
        %1225 = vmatprep.subr.bf16.mxu0 0
        %1226 = vmatpush1.bf16.msra.mxu0 0
        %1227 = vmatprep.subr.bf16.mxu0 0
        %1228 = vmatpush1.bf16.msra.mxu0 0
        %1229 = vmatprep.subr.bf16.mxu0 0
        %1230 = vmatpush1.bf16.msra.mxu0 0
        %1231 = vmatprep.subr.bf16.mxu0 0
        %1232 = vmatpush1.bf16.msra.mxu0 0
        %1233 = vmatprep.mubr.bf16.mxu0 0
        %1234 = vmatmul.mubr.bf16.gmra.mrb[0].mxu0 %v1199
        %v1235 = vpop.f32.mrb[0].mxu0
        %v1236 = vadd.f32 %v1166, %v1235
        %v1237 = vpop.f32.mrb[0].mxu0
        %v1238 = vpop.f32.mrb[0].mxu0
        %v1239 = vpop.f32.mrb[0].mxu0
        %1240 = vdwg.mxu0
        %v1241 = vxor.u32 %v1236, 2147483648
        %v1242 = vmul.f32 %v1241, 1.442695
        %v1243 = vpow.pop %v1242
        %v1244 = vadd.f32 %v1243, 1.0
        %v1245 = vrcp.pop %v1244
        %v1246 = vmul.f32 1.0, %v1245
        %1248 = vrot.lane.b32.xlu0 %v1246, 96
        %v1249 = vpop.permute.xlu0 %1248
        %v1251 = vmul.f32 %v1236, %v1249
        %v1252 = vpack.c.bf16 %v1251, %v1251
        %v1253 = vld [vmem:[%s7] sm:$0xf]
        %v1254 = vld [vmem:[%s7 + $0x4] sm:$0xf]
        %v1255 = vld [vmem:[%s7 + $0x8] sm:$0xf]
        %v1256 = vld [vmem:[%s7 + $0xc] sm:$0xf]
        %v1261 = vunpack.c.l.b16 %v1253
        %v1262 = vunpack.c.l.b16 %v1254
        %v1263 = vunpack.c.l.b16 %v1255
        %v1264 = vunpack.c.l.b16 %v1256
        %v1265 = vpack.c.b16 %v1262, %v1261
        %v1266 = vpack.c.b16 %v1264, %v1263
        %vm1269 = vcmask 261120
        %v1271 = vsel %vm1269, %v1252, 0
        %1273 = vmatprep.subr.bf16.mxu0 0
        %1274 = vmatpush1.bf16.msra.mxu0 %v1265
        %1275 = vmatprep.subr.bf16.mxu0 0
        %1276 = vmatpush1.bf16.msra.mxu0 %v1266
        %1277 = vmatprep.subr.bf16.mxu0 0
        %1278 = vmatpush1.bf16.msra.mxu0 0
        %1279 = vmatprep.subr.bf16.mxu0 0
        %1280 = vmatpush1.bf16.msra.mxu0 0
        %1281 = vmatprep.subr.bf16.mxu0 0
        %1282 = vmatpush1.bf16.msra.mxu0 0
        %1283 = vmatprep.subr.bf16.mxu0 0
        %1284 = vmatpush1.bf16.msra.mxu0 0
        %1285 = vmatprep.subr.bf16.mxu0 0
        %1286 = vmatpush1.bf16.msra.mxu0 0
        %1287 = vmatprep.subr.bf16.mxu0 0
        %1288 = vmatpush1.bf16.msra.mxu0 0
        %1289 = vmatprep.subr.bf16.mxu0 0
        %1290 = vmatpush1.bf16.msra.mxu0 0
        %1291 = vmatprep.subr.bf16.mxu0 0
        %1292 = vmatpush1.bf16.msra.mxu0 0
        %1293 = vmatprep.subr.bf16.mxu0 0
        %1294 = vmatpush1.bf16.msra.mxu0 0
        %1295 = vmatprep.subr.bf16.mxu0 0
        %1296 = vmatpush1.bf16.msra.mxu0 0
        %1297 = vmatprep.subr.bf16.mxu0 0
        %1298 = vmatpush1.bf16.msra.mxu0 0
        %1299 = vmatprep.subr.bf16.mxu0 0
        %1300 = vmatpush1.bf16.msra.mxu0 0
        %1301 = vmatprep.subr.bf16.mxu0 0
        %1302 = vmatpush1.bf16.msra.mxu0 0
        %1303 = vmatprep.subr.bf16.mxu0 0
        %1304 = vmatpush1.bf16.msra.mxu0 0
        %1305 = vmatprep.mubr.bf16.mxu0 0
        %1306 = vmatmul.mubr.bf16.gmra.mrb[0].mxu0 %v1271
        %v1307 = vpop.f32.mrb[0].mxu0
        %v1308 = vadd.f32 0.0, %v1307
        %v1309 = vpop.f32.mrb[0].mxu0
        %v1310 = vpop.f32.mrb[0].mxu0
        %v1311 = vpop.f32.mrb[0].mxu0
        %1312 = vdwg.mxu0
        %v1313 = vmul.f32 %v1308, 0.5
        %v1314 = vmul.f32 %v1308, 0.70710677
        %v1315 = vand.u32 2147483647, %v1314
        %v1316 = vmul.f32 %v1315, 0.5
        %v1317 = vadd.f32 %v1316, 1.0
        %v1318 = vrcp.pop %v1317
        %v1319 = vmul.f32 %v1318, 0.17087276
        %v1320 = vadd.f32 %v1319, -0.82215226
        %v1321 = vmul.f32 %v1318, %v1320
        %v1322 = vadd.f32 %v1321, 1.4885159
        %v1323 = vmul.f32 %v1318, %v1322
        %v1324 = vadd.f32 %v1323, -1.135204
        %v1325 = vmul.f32 %v1318, %v1324
        %v1326 = vadd.f32 %v1325, 0.27886808
        %v1327 = vmul.f32 %v1318, %v1326
        %v1328 = vadd.f32 %v1327, -0.18628806
        %v1329 = vmul.f32 %v1318, %v1328
        %v1330 = vadd.f32 %v1329, 0.09678418
        %v1331 = vmul.f32 %v1318, %v1330
        %v1332 = vadd.f32 %v1331, 0.37409195
        %v1333 = vmul.f32 %v1318, %v1332
        %v1334 = vadd.f32 %v1333, 1.0000237
        %v1335 = vmul.f32 %v1318, %v1334
        %v1336 = vadd.f32 %v1335, -1.2655122
        %v1337 = vsub.f32 0.0, %v1315
        %v1338 = vmul.f32 %v1337, %v1315
        %v1339 = vadd.f32 %v1338, %v1336
        %v1340 = vmul.f32 %v1339, 1.442695
        %v1341 = vpow.pop %v1340
        %v1342 = vmul.f32 %v1318, %v1341
        %v1343 = vsub.f32 1.0, %v1342
        %vm1344 = vcmp.ge.f32.partialorder %v1314, 0.0
        %v1345 = vsub.f32 0.0, %v1343
        %v1346 = vsel %vm1344, %v1343, %v1345
        %v1347 = vadd.f32 %v1346, 1.0
        %v1348 = vmul.f32 %v1313, %v1347
        %v1349 = vpack.c.bf16 %v1348, %v1348
        %v1350 = vld [vmem:[%s8] sm:$0xf]
        %v1351 = vld [vmem:[%s8 + $0x4] sm:$0xf]
        %v1352 = vld [vmem:[%s8 + $0x8] sm:$0xf]
        %v1353 = vld [vmem:[%s8 + $0xc] sm:$0xf]
        %v1354 = vld [vmem:[%s8 + $0x10] sm:$0xf]
        %v1355 = vld [vmem:[%s8 + $0x14] sm:$0xf]
        %v1356 = vld [vmem:[%s8 + $0x18] sm:$0xf]
        %v1357 = vld [vmem:[%s8 + $0x1c] sm:$0xf]
        %v1366 = vunpack.c.l.b16 %v1350
        %v1367 = vunpack.c.l.b16 %v1351
        %v1368 = vunpack.c.l.b16 %v1352
        %v1369 = vunpack.c.l.b16 %v1353
        %v1370 = vunpack.c.l.b16 %v1354
        %v1371 = vunpack.c.l.b16 %v1355
        %v1372 = vunpack.c.l.b16 %v1356
        %v1373 = vunpack.c.l.b16 %v1357
        %v1374 = vpack.c.b16 %v1367, %v1366
        %v1375 = vpack.c.b16 %v1369, %v1368
        %v1376 = vpack.c.b16 %v1371, %v1370
        %v1377 = vpack.c.b16 %v1373, %v1372
        %vm1382 = vcmask 523264
        %v1384 = vsel %vm1382, %v1349, 0
        %1386 = vmatprep.subr.bf16.mxu0 0
        %1387 = vmatpush1.bf16.msra.mxu0 %v1374
        %1388 = vmatprep.subr.bf16.mxu0 0
        %1389 = vmatpush1.bf16.msra.mxu0 %v1375
        %1390 = vmatprep.subr.bf16.mxu0 0
        %1391 = vmatpush1.bf16.msra.mxu0 %v1376
        %1392 = vmatprep.subr.bf16.mxu0 0
        %1393 = vmatpush1.bf16.msra.mxu0 %v1377
        %1394 = vmatprep.subr.bf16.mxu0 0
        %1395 = vmatpush1.bf16.msra.mxu0 0
        %1396 = vmatprep.subr.bf16.mxu0 0
        %1397 = vmatpush1.bf16.msra.mxu0 0
        %1398 = vmatprep.subr.bf16.mxu0 0
        %1399 = vmatpush1.bf16.msra.mxu0 0
        %1400 = vmatprep.subr.bf16.mxu0 0
        %1401 = vmatpush1.bf16.msra.mxu0 0
        %1402 = vmatprep.subr.bf16.mxu0 0
        %1403 = vmatpush1.bf16.msra.mxu0 0
        %1404 = vmatprep.subr.bf16.mxu0 0
        %1405 = vmatpush1.bf16.msra.mxu0 0
        %1406 = vmatprep.subr.bf16.mxu0 0
        %1407 = vmatpush1.bf16.msra.mxu0 0
        %1408 = vmatprep.subr.bf16.mxu0 0
        %1409 = vmatpush1.bf16.msra.mxu0 0
        %1410 = vmatprep.subr.bf16.mxu0 0
        %1411 = vmatpush1.bf16.msra.mxu0 0
        %1412 = vmatprep.subr.bf16.mxu0 0
        %1413 = vmatpush1.bf16.msra.mxu0 0
        %1414 = vmatprep.subr.bf16.mxu0 0
        %1415 = vmatpush1.bf16.msra.mxu0 0
        %1416 = vmatprep.subr.bf16.mxu0 0
        %1417 = vmatpush1.bf16.msra.mxu0 0
        %1418 = vmatprep.mubr.bf16.mxu0 0
        %1419 = vmatmul.mubr.bf16.gmra.mrb[0].mxu0 %v1384
        %v1420 = vpop.f32.mrb[0].mxu0
        %v1421 = vadd.f32 %v1251, %v1420
        %v1422 = vpop.f32.mrb[0].mxu0
        %v1423 = vpop.f32.mrb[0].mxu0
        %v1424 = vpop.f32.mrb[0].mxu0
        %1425 = vdwg.mxu0
        %v1426 = vsel %vm1269, %v1421, 0.0
        %1427 = vadd.xlane.f32.xlu0 %v1426
        %v1428 = vpop.xlane.xlu0 %1427
        %v1429 = vrcp.pop 32.0
        %v1430 = vmul.f32 %v1428, %v1429
        %v1431 = vsub.f32 %v1421, %v1430
        %v1432 = vmul.f32 %v1431, %v1431
        %v1433 = vsel %vm1269, %v1432, 0.0
        %1434 = vadd.xlane.f32.xlu0 %v1433
        %v1435 = vpop.xlane.xlu0 %1434
        %v1436 = vmul.f32 %v1435, %v1429
        %v1437 = vadd.f32 %v1436, 1e-05
        %v1438 = vrsqrt.pop %v1437
        %v1439 = vmul.f32 %v1431, %v1438
        %v1440 = vld [vmem:[%s9] sm:$0x1]
        %v1442 = vlaneseq
        %v1443 = vshrl.u32 %v1442, 7
        %v1444 = vsub.s32 0, %v1443
        %v1445 = vrot.slane %v1440, %v1444
        %v1447 = vmul.f32 %v1439, %v1445
        %v1448 = vld [vmem:[%s10] sm:$0x1]
        %v1450 = vlaneseq
        %v1451 = vshrl.u32 %v1450, 7
        %v1452 = vsub.s32 0, %v1451
        %v1453 = vrot.slane %v1448, %v1452
        %v1455 = vadd.f32 %v1447, %v1453
        %1456 = vst.msk [vmem:[%s403] sm:$0xff] %vm1269, %v1455
        %s1457 = sand.u32 %s285, 1
        %s1458 = scalar_lea.sflag [#allocation6], %s1457
        %s1459 = sand.u32 %s285, 1
        %s1460 = smul.addr %s1459, 8
        %s1461 = scalar_lea.vmem [#allocation5], %s1460
        // Predicated region
        $region65: #{_lambda_.1} parent=63 // pred_check
          %p1462 = pneg %p295
        $region66: #{_lambda_.1} parent=63 // pred_check_branch
          %1464 = sbr.rel (%p1462) target = $region68
        $region67: #{_lambda_.1} parent=63 // pred_region
          %s1466 = ssub.s32 128, 128
          %1467 = vsyncadd %s1458, %s1466
          %s1468 = smul.addr %s29, 2
          %s1469 = sadd.s32 %s30, %s1468
          %s1470 = smul.addr %s1469, 128
          %s1471 = scalar_lea.hbm %s11, %s1470
          %s1473 = sshll.u32 %s1461, 4
          %s1474 = int_to_ptr.vmem [resolvable:$true] %s1473
          %1476 = dma.vmem_to_hbm [thread:$0]  %s1474, 128, %s1471, %s1458
        $region68: #{_lambda_.1} parent=63 // pred_fallthru
          _
      $region64: #{_lambda_.1} parent=5 // pred_fallthru
        _
      %p1477 = scmp.le.s32.totalorder 2, %s20
      // Predicated region
      $region69: #{_lambda_.1} parent=5 // pred_check
        %p1478 = pneg %p1477
      $region70: #{_lambda_.1} parent=5 // pred_check_branch
        %1480 = sbr.rel (%p1478) target = $region72
      $region71: #{_lambda_.1} parent=5 // pred_region
        %s1481 = ssub.s32 %s20, 2
        // Predicated region
        $region73: #{_lambda_.1} parent=71 // pred_check
          %p1482 = pneg %p301
        $region74: #{_lambda_.1} parent=71 // pred_check_branch
          %1484 = sbr.rel (%p1482) target = $region76
        $region75: #{_lambda_.1} parent=71 // pred_region
          %s1485 = sand.u32 %s286, 1
          %s1486 = scalar_lea.sflag [#allocation6], %s1485
          %s1487 = sand.u32 %s286, 1
          %s1488 = smul.addr %s1487, 8
          %s1489 = scalar_lea.vmem [#allocation5], %s1488
          %1490 = dma.done %s1486, 128
        $region76: #{_lambda_.1} parent=71 // pred_fallthru
          _
      $region72: #{_lambda_.1} parent=5 // pred_fallthru
        _
    $region6: #{_lambda_.1} parent=1 // loop_footer
      %s24 = sadd.s32 1, %s20
    $region7: #{_lambda_.1} parent=1 // loop_footer_branch
      %19 = sbr.rel target = $region3
    $region8: #{_lambda_.1} parent=1 // loop_exit
      _
    %1491 = vsyncpa [#allocation6], 1
    %s1492 = scalar_lea.sflag [#allocation6], 1
    %1493 = vsyncpa %s1492, 1

</llo_original>
